<compile_context>
chip_gen: v5e
topology: v5e:2x2
jax: 0.10.0
libtpu: 0.0.40
codegen_flags: <defaults>
</compile_context>

<pallas_src>
import math

import jax
import jax.numpy as jnp
from jax import lax
from jax.experimental import pallas as pl
from jax.experimental.pallas import tpu as pltpu


def _make_kernel(L, S, N, E, nhead, eps=1e-5):
    hd = E // nhead

    def kernel(ident_ref, tgt_ref, key_ref, mem_ref, qpos_ref, kpos_ref,
               w_ref, b_ref, out_ref):
        # activation refs are (L, N*E) / (S, N*E); params: w (4,E,E), b (8,E)
        w = w_ref[...]                        # [wq^T*scale, wk^T, wv^T, wo^T]
        bias = b_ref[...]                     # [bq*scale, bk, bv, bo, gamma, beta, 0, 0]
        bq, bk, bv, bo = bias[0:1], bias[1:2], bias[2:3], bias[3:4]
        gamma, beta = bias[4:5], bias[5:6]

        for n in range(N):                    # N (videos per step) is tiny: static unroll
            cols = slice(n * E, (n + 1) * E)
            q_in = tgt_ref[:, cols] + qpos_ref[:, cols]     # (L, E)  with_pos_embed
            k_in = key_ref[:, cols] + kpos_ref[:, cols]     # (S, E)
            v_in = mem_ref[:, cols]                         # (S, E)

            # in-projections: y = x @ W^T + b (weights pre-transposed; Wq pre-scaled)
            q = jnp.dot(q_in, w[0], preferred_element_type=jnp.float32) + bq
            k = jnp.dot(k_in, w[1], preferred_element_type=jnp.float32) + bk
            v = jnp.dot(v_in, w[2], preferred_element_type=jnp.float32) + bv

            # one 2-D transpose each; the per-head slices below are then
            # sublane-aligned row slices (hd % 8 == 0), not lane slices.
            qT = q.T                                        # (E, L)
            kT = k.T                                        # (E, S)
            vT = v.T                                        # (E, S)

            oT_rows = []
            for h in range(nhead):                          # static unroll; nhead is small
                r = slice(h * hd, (h + 1) * hd)
                # scores = q_h @ k_h^T  computed as (q_h^T)^T @ (k_h^T): MXU takes the
                # transposed operands directly (contracting dim 0 of both).
                s = lax.dot_general(qT[r, :], kT[r, :],
                                    (((0,), (0,)), ((), ())),
                                    preferred_element_type=jnp.float32)    # (L, S)
                s = s - jnp.max(s, axis=-1, keepdims=True)
                p = jnp.exp(s)
                den = jnp.sum(p, axis=-1, keepdims=True)
                inv = pl.reciprocal(den, approx=True)       # EUP slot
                inv = inv * (2.0 - den * inv)               # 1 Newton step -> f32 accuracy
                p = p * inv
                # head output, transposed: (p @ v_h)^T = v_h^T @ p^T
                oT = lax.dot_general(vT[r, :], p,
                                     (((1,), (1,)), ((), ())),
                                     preferred_element_type=jnp.float32)   # (hd, L)
                oT_rows.append(oT)

            attn = jnp.concatenate(oT_rows, axis=0).T       # (L, E)  sublane concat + 1 transpose
            o = jnp.dot(attn, w[3], preferred_element_type=jnp.float32) + bo

            # residual (dropout p=0.0 -> identity) + LayerNorm   (forward_post)
            x = ident_ref[:, cols] + o
            mu = jnp.mean(x, axis=-1, keepdims=True)
            var = jnp.mean((x - mu) ** 2, axis=-1, keepdims=True)
            y = (x - mu) * lax.rsqrt(var + eps)
            out_ref[:, cols] = (y * gamma + beta).astype(out_ref.dtype)

    return kernel


def referring_cross_attention(identify, tgt, key, memory, params, *, nhead,
                              pos=None, query_pos=None, standard=False):
    """Inputs are seq-first (L, N, E) / (S, N, E), matching the PyTorch module."""
    L, N, E = tgt.shape
    S = key.shape[0]
    assert E % nhead == 0, "d_model must be divisible by nhead"

    if standard:                    # tgt = tgt * 0.0 + identify
        tgt = tgt * 0.0 + identify
    if query_pos is None:
        query_pos = jnp.zeros_like(tgt)
    if pos is None:
        pos = jnp.zeros_like(key)
    # TODO(synk): memory_mask / memory_key_padding_mask not plumbed (None in this config).
    # TODO(synk): forward_pre (normalize_before=True) path not implemented (module default is post).
    # TODO(synk): for long memory sequences S, tile K/V over a grid axis (online softmax)
    #             and cap VMEM (v7x has 64 MiB); bf16 matmul operands pay off on v6e/v7x.

    wq_t, wk_t, wv_t, bq, bk, bv, wo_t, bo, gamma, beta = params
    scale = 1.0 / math.sqrt(E // nhead)
    # pack parameters: fold the attention scale into Wq / bq.
    w_stack = jnp.stack([wq_t * scale, wk_t, wv_t, wo_t], axis=0)            # (4, E, E)
    b_stack = jnp.concatenate([bq * scale, bk, bv, bo, gamma, beta,
                               jnp.zeros((2, E), bq.dtype)], axis=0)          # (8, E)

    # free reshapes to lane-dense 2-D slabs; NO HBM transposes of activations.
    to2d = lambda x: x.reshape(x.shape[0], -1)
    ident2, tgt2, key2, mem2, qpos2, kpos2 = map(
        to2d, (identify, tgt, key, memory, query_pos, pos))

    def full_spec(shape):
        if len(shape) == 2:
            return pl.BlockSpec(shape, lambda i: (0, 0))
        return pl.BlockSpec(shape, lambda i: (0, 0, 0))

    out2d = pl.pallas_call(
        _make_kernel(L, S, N, E, nhead),
        out_shape=jax.ShapeDtypeStruct((L, N * E), tgt.dtype),
        grid=(1,),          # whole (small) problem in one step; all blocks are full arrays
        in_specs=[
            full_spec((L, N * E)), full_spec((L, N * E)),
            full_spec((S, N * E)), full_spec((S, N * E)),
            full_spec((L, N * E)), full_spec((S, N * E)),
            full_spec((4, E, E)), full_spec((8, E)),
        ],
        out_specs=full_spec((L, N * E)),
        compiler_params=pltpu.CompilerParams(dimension_semantics=("arbitrary",)),
    )(ident2, tgt2, key2, mem2, qpos2, kpos2, w_stack, b_stack)

    return out2d.reshape(L, N, E)


def init_params(key, d_model):
    """Deterministic synthetic parameters mirroring the module's __init__ shapes.
    in_proj_weight (3d, d) / out_proj.weight (d, d): xavier_uniform; biases 0; LN gamma=1, beta=0."""
    k1, k2 = jax.random.split(key)

    def xavier(k, shape):
        fan_out, fan_in = shape
        limit = math.sqrt(6.0 / (fan_in + fan_out))
        return jax.random.uniform(k, shape, jnp.float32, -limit, limit)

    in_proj_w = xavier(k1, (3 * d_model, d_model))
    out_proj_w = xavier(k2, (d_model, d_model))
    wq, wk, wv = jnp.split(in_proj_w, 3, axis=0)
    zeros = jnp.zeros((1, d_model), jnp.float32)
    ones = jnp.ones((1, d_model), jnp.float32)
    # pre-transpose so the kernel computes x @ W^T as x @ W_t
    return (wq.T, wk.T, wv.T, zeros, zeros, zeros, out_proj_w.T, zeros, ones, zeros)


def _ref_forward(identify, tgt, key, memory, params, nhead, pos, query_pos, eps=1e-5):
    """Pure-JAX reference of forward_post for correctness check."""
    wq_t, wk_t, wv_t, bq, bk, bv, wo_t, bo, gamma, beta = params
    L, N, E = tgt.shape
    S = key.shape[0]
    hd = E // nhead
    q = (tgt + query_pos) @ wq_t + bq[0]
    k = (key + pos) @ wk_t + bk[0]
    v = memory @ wv_t + bv[0]
    qh = q.reshape(L, N, nhead, hd).transpose(1, 2, 0, 3)
    kh = k.reshape(S, N, nhead, hd).transpose(1, 2, 0, 3)
    vh = v.reshape(S, N, nhead, hd).transpose(1, 2, 0, 3)
    s = jnp.einsum('nhld,nhsd->nhls', qh, kh) / math.sqrt(hd)
    p = jax.nn.softmax(s, axis=-1)
    a = jnp.einsum('nhls,nhsd->nhld', p, vh).transpose(2, 0, 1, 3).reshape(L, N, E)
    o = a @ wo_t + bo[0]
    x = identify + o
    mu = x.mean(-1, keepdims=True)
    var = ((x - mu) ** 2).mean(-1, keepdims=True)
    return (x - mu) / jnp.sqrt(var + eps) * gamma[0] + beta[0]


if __name__ == "__main__":
    d_model, nhead = 32, 4
    L, S, N = 8, 8, 2        # queries, source length, batch

    root = jax.random.PRNGKey(0)
    kp, ki, kt, kk, km, kq, kpe = jax.random.split(root, 7)

    params = init_params(kp, d_model)
    identify = jax.random.normal(ki, (L, N, d_model), jnp.float32)
    tgt = jax.random.normal(kt, (L, N, d_model), jnp.float32)
    key = jax.random.normal(kk, (S, N, d_model), jnp.float32)
    memory = jax.random.normal(km, (S, N, d_model), jnp.float32)
    query_pos = jax.random.normal(kq, (L, N, d_model), jnp.float32)
    pos = jax.random.normal(kpe, (S, N, d_model), jnp.float32)

    out = referring_cross_attention(identify, tgt, key, memory, params,
                                    nhead=nhead, pos=pos, query_pos=query_pos)
    out = jax.block_until_ready(out)

    ref = _ref_forward(identify, tgt, key, memory, params, nhead, pos, query_pos)
    assert out.shape == (L, N, d_model)
    # 5e-4 tolerance: approx-reciprocal (+Newton step) softmax and MXU f32 accumulation order.
    assert jnp.allclose(out, ref, atol=5e-4, rtol=5e-4), "mismatch vs pure-JAX reference"

    print("KERNEL_OK")
</pallas_src>

<mosaic_0001>
module attributes {stable_mosaic.version = 11 : i64} {
  func.func @kernel(%arg0: i32, %arg1: memref<8x64xf32, #tpu.memory_space<vmem>>, %arg2: memref<8x64xf32, #tpu.memory_space<vmem>>, %arg3: memref<8x64xf32, #tpu.memory_space<vmem>>, %arg4: memref<8x64xf32, #tpu.memory_space<vmem>>, %arg5: memref<8x64xf32, #tpu.memory_space<vmem>>, %arg6: memref<8x64xf32, #tpu.memory_space<vmem>>, %arg7: memref<4x32x32xf32, #tpu.memory_space<vmem>>, %arg8: memref<8x32xf32, #tpu.memory_space<vmem>>, %arg9: memref<8x64xf32, #tpu.memory_space<vmem>>) attributes {dimension_semantics = [#tpu.dimension_semantics<arbitrary>], iteration_bounds = array<i64: 1>, scalar_prefetch = 0 : i64, scratch_operands = 0 : i64, tpu.core_type = #tpu.core_type<tc>, window_params = [{pipeline_mode = #tpu.pipeline_mode<synchronous>, transform_indices = @transform_0, window_bounds = array<i64: 8, 64>}, {pipeline_mode = #tpu.pipeline_mode<synchronous>, transform_indices = @transform_1, window_bounds = array<i64: 8, 64>}, {pipeline_mode = #tpu.pipeline_mode<synchronous>, transform_indices = @transform_2, window_bounds = array<i64: 8, 64>}, {pipeline_mode = #tpu.pipeline_mode<synchronous>, transform_indices = @transform_3, window_bounds = array<i64: 8, 64>}, {pipeline_mode = #tpu.pipeline_mode<synchronous>, transform_indices = @transform_4, window_bounds = array<i64: 8, 64>}, {pipeline_mode = #tpu.pipeline_mode<synchronous>, transform_indices = @transform_5, window_bounds = array<i64: 8, 64>}, {pipeline_mode = #tpu.pipeline_mode<synchronous>, transform_indices = @transform_6, window_bounds = array<i64: 4, 32, 32>}, {pipeline_mode = #tpu.pipeline_mode<synchronous>, transform_indices = @transform_7, window_bounds = array<i64: 8, 32>}, {pipeline_mode = #tpu.pipeline_mode<synchronous>, transform_indices = @transform_8, window_bounds = array<i64: 8, 64>}]} {
    %c0 = arith.constant 0 : index
    %c0_0 = arith.constant 0 : index
    %c0_1 = arith.constant 0 : index
    %0 = vector.load %arg7[%c0, %c0_0, %c0_1] : memref<4x32x32xf32, #tpu.memory_space<vmem>>, vector<4x32x32xf32>
    %c0_2 = arith.constant 0 : index
    %c0_3 = arith.constant 0 : index
    %1 = vector.load %arg8[%c0_2, %c0_3] : memref<8x32xf32, #tpu.memory_space<vmem>>, vector<8x32xf32>
    %2 = vector.extract_strided_slice %1 {offsets = [0, 0], sizes = [1, 32], strides = [1, 1]} : vector<8x32xf32> to vector<1x32xf32>
    %3 = vector.extract_strided_slice %1 {offsets = [1, 0], sizes = [1, 32], strides = [1, 1]} : vector<8x32xf32> to vector<1x32xf32>
    %4 = vector.extract_strided_slice %1 {offsets = [2, 0], sizes = [1, 32], strides = [1, 1]} : vector<8x32xf32> to vector<1x32xf32>
    %5 = vector.extract_strided_slice %1 {offsets = [3, 0], sizes = [1, 32], strides = [1, 1]} : vector<8x32xf32> to vector<1x32xf32>
    %6 = vector.extract_strided_slice %1 {offsets = [4, 0], sizes = [1, 32], strides = [1, 1]} : vector<8x32xf32> to vector<1x32xf32>
    %7 = vector.extract_strided_slice %1 {offsets = [5, 0], sizes = [1, 32], strides = [1, 1]} : vector<8x32xf32> to vector<1x32xf32>
    %c0_4 = arith.constant 0 : index
    %c0_5 = arith.constant 0 : index
    %8 = vector.load %arg2[%c0_4, %c0_5] : memref<8x64xf32, #tpu.memory_space<vmem>>, vector<8x32xf32>
    %c0_6 = arith.constant 0 : index
    %c0_7 = arith.constant 0 : index
    %9 = vector.load %arg5[%c0_6, %c0_7] : memref<8x64xf32, #tpu.memory_space<vmem>>, vector<8x32xf32>
    %10 = arith.addf %8, %9 : vector<8x32xf32>
    %c0_8 = arith.constant 0 : index
    %c0_9 = arith.constant 0 : index
    %11 = vector.load %arg3[%c0_8, %c0_9] : memref<8x64xf32, #tpu.memory_space<vmem>>, vector<8x32xf32>
    %c0_10 = arith.constant 0 : index
    %c0_11 = arith.constant 0 : index
    %12 = vector.load %arg6[%c0_10, %c0_11] : memref<8x64xf32, #tpu.memory_space<vmem>>, vector<8x32xf32>
    %13 = arith.addf %11, %12 : vector<8x32xf32>
    %c0_12 = arith.constant 0 : index
    %c0_13 = arith.constant 0 : index
    %14 = vector.load %arg4[%c0_12, %c0_13] : memref<8x64xf32, #tpu.memory_space<vmem>>, vector<8x32xf32>
    %15 = vector.extract_strided_slice %0 {offsets = [0, 0, 0], sizes = [1, 32, 32], strides = [1, 1, 1]} : vector<4x32x32xf32> to vector<1x32x32xf32>
    %16 = vector.shape_cast %15 : vector<1x32x32xf32> to vector<32x32xf32>
    %cst = arith.constant dense<0.000000e+00> : vector<8x32xf32>
    %17 = tpu.matmul %10, %16, %cst {dimension_numbers = #tpu.dot_dimension_numbers<[1], [0], [0], [1], [0, 0, 1, 1], [], []>} : vector<8x32xf32>, vector<32x32xf32>, vector<8x32xf32> -> vector<8x32xf32>
    %18 = vector.broadcast %2 : vector<1x32xf32> to vector<8x32xf32>
    %19 = arith.addf %17, %18 : vector<8x32xf32>
    %20 = vector.extract_strided_slice %0 {offsets = [1, 0, 0], sizes = [1, 32, 32], strides = [1, 1, 1]} : vector<4x32x32xf32> to vector<1x32x32xf32>
    %21 = vector.shape_cast %20 : vector<1x32x32xf32> to vector<32x32xf32>
    %cst_14 = arith.constant dense<0.000000e+00> : vector<8x32xf32>
    %22 = tpu.matmul %13, %21, %cst_14 {dimension_numbers = #tpu.dot_dimension_numbers<[1], [0], [0], [1], [0, 0, 1, 1], [], []>} : vector<8x32xf32>, vector<32x32xf32>, vector<8x32xf32> -> vector<8x32xf32>
    %23 = vector.broadcast %3 : vector<1x32xf32> to vector<8x32xf32>
    %24 = arith.addf %22, %23 : vector<8x32xf32>
    %25 = vector.extract_strided_slice %0 {offsets = [2, 0, 0], sizes = [1, 32, 32], strides = [1, 1, 1]} : vector<4x32x32xf32> to vector<1x32x32xf32>
    %26 = vector.shape_cast %25 : vector<1x32x32xf32> to vector<32x32xf32>
    %cst_15 = arith.constant dense<0.000000e+00> : vector<8x32xf32>
    %27 = tpu.matmul %14, %26, %cst_15 {dimension_numbers = #tpu.dot_dimension_numbers<[1], [0], [0], [1], [0, 0, 1, 1], [], []>} : vector<8x32xf32>, vector<32x32xf32>, vector<8x32xf32> -> vector<8x32xf32>
    %28 = vector.broadcast %4 : vector<1x32xf32> to vector<8x32xf32>
    %29 = arith.addf %27, %28 : vector<8x32xf32>
    %30 = tpu.transpose %19, [1, 0] : vector<8x32xf32> -> vector<32x8xf32>
    %31 = tpu.transpose %24, [1, 0] : vector<8x32xf32> -> vector<32x8xf32>
    %32 = tpu.transpose %29, [1, 0] : vector<8x32xf32> -> vector<32x8xf32>
    %33 = vector.extract_strided_slice %30 {offsets = [0, 0], sizes = [8, 8], strides = [1, 1]} : vector<32x8xf32> to vector<8x8xf32>
    %34 = vector.extract_strided_slice %31 {offsets = [0, 0], sizes = [8, 8], strides = [1, 1]} : vector<32x8xf32> to vector<8x8xf32>
    %cst_16 = arith.constant dense<0.000000e+00> : vector<8x8xf32>
    %35 = tpu.matmul %33, %34, %cst_16 {dimension_numbers = #tpu.dot_dimension_numbers<[0], [0], [1], [1], [0, 1, 1, 1], [], []>} : vector<8x8xf32>, vector<8x8xf32>, vector<8x8xf32> -> vector<8x8xf32>
    %cst_17 = arith.constant dense<0xFF800000> : vector<8xf32>
    %36 = vector.multi_reduction <maximumf>, %35, %cst_17 [1] : vector<8x8xf32> to vector<8xf32>
    %37 = vector.shape_cast %36 : vector<8xf32> to vector<8x1xf32>
    %38 = vector.broadcast %37 : vector<8x1xf32> to vector<8x8xf32>
    %39 = arith.subf %35, %38 : vector<8x8xf32>
    %40 = math.exp %39 : vector<8x8xf32>
    %cst_18 = arith.constant dense<0.000000e+00> : vector<8xf32>
    %41 = vector.multi_reduction <add>, %40, %cst_18 [1] : vector<8x8xf32> to vector<8xf32>
    %42 = vector.shape_cast %41 : vector<8xf32> to vector<8x1xf32>
    %43 = tpu.reciprocal %42 {approx = true} : vector<8x1xf32> -> vector<8x1xf32>
    %44 = arith.mulf %42, %43 : vector<8x1xf32>
    %cst_19 = arith.constant 2.000000e+00 : f32
    %45 = vector.broadcast %cst_19 : f32 to vector<8x1xf32>
    %46 = arith.subf %45, %44 : vector<8x1xf32>
    %47 = arith.mulf %43, %46 : vector<8x1xf32>
    %48 = vector.broadcast %47 : vector<8x1xf32> to vector<8x8xf32>
    %49 = arith.mulf %40, %48 : vector<8x8xf32>
    %50 = vector.extract_strided_slice %32 {offsets = [0, 0], sizes = [8, 8], strides = [1, 1]} : vector<32x8xf32> to vector<8x8xf32>
    %cst_20 = arith.constant dense<0.000000e+00> : vector<8x8xf32>
    %51 = tpu.matmul %50, %49, %cst_20 {dimension_numbers = #tpu.dot_dimension_numbers<[1], [1], [0], [0], [0, 0, 1, 0], [], []>} : vector<8x8xf32>, vector<8x8xf32>, vector<8x8xf32> -> vector<8x8xf32>
    %52 = vector.extract_strided_slice %30 {offsets = [8, 0], sizes = [8, 8], strides = [1, 1]} : vector<32x8xf32> to vector<8x8xf32>
    %53 = vector.extract_strided_slice %31 {offsets = [8, 0], sizes = [8, 8], strides = [1, 1]} : vector<32x8xf32> to vector<8x8xf32>
    %cst_21 = arith.constant dense<0.000000e+00> : vector<8x8xf32>
    %54 = tpu.matmul %52, %53, %cst_21 {dimension_numbers = #tpu.dot_dimension_numbers<[0], [0], [1], [1], [0, 1, 1, 1], [], []>} : vector<8x8xf32>, vector<8x8xf32>, vector<8x8xf32> -> vector<8x8xf32>
    %cst_22 = arith.constant dense<0xFF800000> : vector<8xf32>
    %55 = vector.multi_reduction <maximumf>, %54, %cst_22 [1] : vector<8x8xf32> to vector<8xf32>
    %56 = vector.shape_cast %55 : vector<8xf32> to vector<8x1xf32>
    %57 = vector.broadcast %56 : vector<8x1xf32> to vector<8x8xf32>
    %58 = arith.subf %54, %57 : vector<8x8xf32>
    %59 = math.exp %58 : vector<8x8xf32>
    %cst_23 = arith.constant dense<0.000000e+00> : vector<8xf32>
    %60 = vector.multi_reduction <add>, %59, %cst_23 [1] : vector<8x8xf32> to vector<8xf32>
    %61 = vector.shape_cast %60 : vector<8xf32> to vector<8x1xf32>
    %62 = tpu.reciprocal %61 {approx = true} : vector<8x1xf32> -> vector<8x1xf32>
    %63 = arith.mulf %61, %62 : vector<8x1xf32>
    %cst_24 = arith.constant 2.000000e+00 : f32
    %64 = vector.broadcast %cst_24 : f32 to vector<8x1xf32>
    %65 = arith.subf %64, %63 : vector<8x1xf32>
    %66 = arith.mulf %62, %65 : vector<8x1xf32>
    %67 = vector.broadcast %66 : vector<8x1xf32> to vector<8x8xf32>
    %68 = arith.mulf %59, %67 : vector<8x8xf32>
    %69 = vector.extract_strided_slice %32 {offsets = [8, 0], sizes = [8, 8], strides = [1, 1]} : vector<32x8xf32> to vector<8x8xf32>
    %cst_25 = arith.constant dense<0.000000e+00> : vector<8x8xf32>
    %70 = tpu.matmul %69, %68, %cst_25 {dimension_numbers = #tpu.dot_dimension_numbers<[1], [1], [0], [0], [0, 0, 1, 0], [], []>} : vector<8x8xf32>, vector<8x8xf32>, vector<8x8xf32> -> vector<8x8xf32>
    %71 = vector.extract_strided_slice %30 {offsets = [16, 0], sizes = [8, 8], strides = [1, 1]} : vector<32x8xf32> to vector<8x8xf32>
    %72 = vector.extract_strided_slice %31 {offsets = [16, 0], sizes = [8, 8], strides = [1, 1]} : vector<32x8xf32> to vector<8x8xf32>
    %cst_26 = arith.constant dense<0.000000e+00> : vector<8x8xf32>
    %73 = tpu.matmul %71, %72, %cst_26 {dimension_numbers = #tpu.dot_dimension_numbers<[0], [0], [1], [1], [0, 1, 1, 1], [], []>} : vector<8x8xf32>, vector<8x8xf32>, vector<8x8xf32> -> vector<8x8xf32>
    %cst_27 = arith.constant dense<0xFF800000> : vector<8xf32>
    %74 = vector.multi_reduction <maximumf>, %73, %cst_27 [1] : vector<8x8xf32> to vector<8xf32>
    %75 = vector.shape_cast %74 : vector<8xf32> to vector<8x1xf32>
    %76 = vector.broadcast %75 : vector<8x1xf32> to vector<8x8xf32>
    %77 = arith.subf %73, %76 : vector<8x8xf32>
    %78 = math.exp %77 : vector<8x8xf32>
    %cst_28 = arith.constant dense<0.000000e+00> : vector<8xf32>
    %79 = vector.multi_reduction <add>, %78, %cst_28 [1] : vector<8x8xf32> to vector<8xf32>
    %80 = vector.shape_cast %79 : vector<8xf32> to vector<8x1xf32>
    %81 = tpu.reciprocal %80 {approx = true} : vector<8x1xf32> -> vector<8x1xf32>
    %82 = arith.mulf %80, %81 : vector<8x1xf32>
    %cst_29 = arith.constant 2.000000e+00 : f32
    %83 = vector.broadcast %cst_29 : f32 to vector<8x1xf32>
    %84 = arith.subf %83, %82 : vector<8x1xf32>
    %85 = arith.mulf %81, %84 : vector<8x1xf32>
    %86 = vector.broadcast %85 : vector<8x1xf32> to vector<8x8xf32>
    %87 = arith.mulf %78, %86 : vector<8x8xf32>
    %88 = vector.extract_strided_slice %32 {offsets = [16, 0], sizes = [8, 8], strides = [1, 1]} : vector<32x8xf32> to vector<8x8xf32>
    %cst_30 = arith.constant dense<0.000000e+00> : vector<8x8xf32>
    %89 = tpu.matmul %88, %87, %cst_30 {dimension_numbers = #tpu.dot_dimension_numbers<[1], [1], [0], [0], [0, 0, 1, 0], [], []>} : vector<8x8xf32>, vector<8x8xf32>, vector<8x8xf32> -> vector<8x8xf32>
    %90 = vector.extract_strided_slice %30 {offsets = [24, 0], sizes = [8, 8], strides = [1, 1]} : vector<32x8xf32> to vector<8x8xf32>
    %91 = vector.extract_strided_slice %31 {offsets = [24, 0], sizes = [8, 8], strides = [1, 1]} : vector<32x8xf32> to vector<8x8xf32>
    %cst_31 = arith.constant dense<0.000000e+00> : vector<8x8xf32>
    %92 = tpu.matmul %90, %91, %cst_31 {dimension_numbers = #tpu.dot_dimension_numbers<[0], [0], [1], [1], [0, 1, 1, 1], [], []>} : vector<8x8xf32>, vector<8x8xf32>, vector<8x8xf32> -> vector<8x8xf32>
    %cst_32 = arith.constant dense<0xFF800000> : vector<8xf32>
    %93 = vector.multi_reduction <maximumf>, %92, %cst_32 [1] : vector<8x8xf32> to vector<8xf32>
    %94 = vector.shape_cast %93 : vector<8xf32> to vector<8x1xf32>
    %95 = vector.broadcast %94 : vector<8x1xf32> to vector<8x8xf32>
    %96 = arith.subf %92, %95 : vector<8x8xf32>
    %97 = math.exp %96 : vector<8x8xf32>
    %cst_33 = arith.constant dense<0.000000e+00> : vector<8xf32>
    %98 = vector.multi_reduction <add>, %97, %cst_33 [1] : vector<8x8xf32> to vector<8xf32>
    %99 = vector.shape_cast %98 : vector<8xf32> to vector<8x1xf32>
    %100 = tpu.reciprocal %99 {approx = true} : vector<8x1xf32> -> vector<8x1xf32>
    %101 = arith.mulf %99, %100 : vector<8x1xf32>
    %cst_34 = arith.constant 2.000000e+00 : f32
    %102 = vector.broadcast %cst_34 : f32 to vector<8x1xf32>
    %103 = arith.subf %102, %101 : vector<8x1xf32>
    %104 = arith.mulf %100, %103 : vector<8x1xf32>
    %105 = vector.broadcast %104 : vector<8x1xf32> to vector<8x8xf32>
    %106 = arith.mulf %97, %105 : vector<8x8xf32>
    %107 = vector.extract_strided_slice %32 {offsets = [24, 0], sizes = [8, 8], strides = [1, 1]} : vector<32x8xf32> to vector<8x8xf32>
    %cst_35 = arith.constant dense<0.000000e+00> : vector<8x8xf32>
    %108 = tpu.matmul %107, %106, %cst_35 {dimension_numbers = #tpu.dot_dimension_numbers<[1], [1], [0], [0], [0, 0, 1, 0], [], []>} : vector<8x8xf32>, vector<8x8xf32>, vector<8x8xf32> -> vector<8x8xf32>
    %109 = tpu.concatenate %51, %70, %89, %108 in 0 : vector<8x8xf32>, vector<8x8xf32>, vector<8x8xf32>, vector<8x8xf32> -> vector<32x8xf32>
    %110 = tpu.transpose %109, [1, 0] : vector<32x8xf32> -> vector<8x32xf32>
    %111 = vector.extract_strided_slice %0 {offsets = [3, 0, 0], sizes = [1, 32, 32], strides = [1, 1, 1]} : vector<4x32x32xf32> to vector<1x32x32xf32>
    %112 = vector.shape_cast %111 : vector<1x32x32xf32> to vector<32x32xf32>
    %cst_36 = arith.constant dense<0.000000e+00> : vector<8x32xf32>
    %113 = tpu.matmul %110, %112, %cst_36 {dimension_numbers = #tpu.dot_dimension_numbers<[1], [0], [0], [1], [0, 0, 1, 1], [], []>} : vector<8x32xf32>, vector<32x32xf32>, vector<8x32xf32> -> vector<8x32xf32>
    %114 = vector.broadcast %5 : vector<1x32xf32> to vector<8x32xf32>
    %115 = arith.addf %113, %114 : vector<8x32xf32>
    %c0_37 = arith.constant 0 : index
    %c0_38 = arith.constant 0 : index
    %116 = vector.load %arg1[%c0_37, %c0_38] : memref<8x64xf32, #tpu.memory_space<vmem>>, vector<8x32xf32>
    %117 = arith.addf %116, %115 : vector<8x32xf32>
    %cst_39 = arith.constant dense<0.000000e+00> : vector<8xf32>
    %118 = vector.multi_reduction <add>, %117, %cst_39 [1] : vector<8x32xf32> to vector<8xf32>
    %119 = vector.shape_cast %118 : vector<8xf32> to vector<8x1xf32>
    %cst_40 = arith.constant 3.200000e+01 : f32
    %120 = vector.broadcast %cst_40 : f32 to vector<8x1xf32>
    %121 = arith.divf %119, %120 : vector<8x1xf32>
    %122 = vector.broadcast %121 : vector<8x1xf32> to vector<8x32xf32>
    %123 = arith.subf %117, %122 : vector<8x32xf32>
    %124 = arith.mulf %123, %123 : vector<8x32xf32>
    %cst_41 = arith.constant dense<0.000000e+00> : vector<8xf32>
    %125 = vector.multi_reduction <add>, %124, %cst_41 [1] : vector<8x32xf32> to vector<8xf32>
    %126 = vector.shape_cast %125 : vector<8xf32> to vector<8x1xf32>
    %cst_42 = arith.constant 3.200000e+01 : f32
    %127 = vector.broadcast %cst_42 : f32 to vector<8x1xf32>
    %128 = arith.divf %126, %127 : vector<8x1xf32>
    %129 = vector.broadcast %121 : vector<8x1xf32> to vector<8x32xf32>
    %130 = arith.subf %117, %129 : vector<8x32xf32>
    %cst_43 = arith.constant 9.99999974E-6 : f32
    %131 = vector.broadcast %cst_43 : f32 to vector<8x1xf32>
    %132 = arith.addf %128, %131 : vector<8x1xf32>
    %133 = math.rsqrt %132 : vector<8x1xf32>
    %134 = vector.broadcast %133 : vector<8x1xf32> to vector<8x32xf32>
    %135 = arith.mulf %130, %134 : vector<8x32xf32>
    %136 = vector.broadcast %6 : vector<1x32xf32> to vector<8x32xf32>
    %137 = arith.mulf %135, %136 : vector<8x32xf32>
    %138 = vector.broadcast %7 : vector<1x32xf32> to vector<8x32xf32>
    %139 = arith.addf %137, %138 : vector<8x32xf32>
    %c0_44 = arith.constant 0 : index
    %c0_45 = arith.constant 0 : index
    %140 = vector.load %arg9[%c0_44, %c0_45] : memref<8x64xf32, #tpu.memory_space<vmem>>, vector<8x32xf32>
    tpu.vector_store %arg9[%c0_44, %c0_45], %139 {strides = array<i32>} : memref<8x64xf32, #tpu.memory_space<vmem>>, vector<8x32xf32>,
    %c0_46 = arith.constant 0 : index
    %c32 = arith.constant 32 : index
    %141 = vector.load %arg2[%c0_46, %c32] : memref<8x64xf32, #tpu.memory_space<vmem>>, vector<8x32xf32>
    %c0_47 = arith.constant 0 : index
    %c32_48 = arith.constant 32 : index
    %142 = vector.load %arg5[%c0_47, %c32_48] : memref<8x64xf32, #tpu.memory_space<vmem>>, vector<8x32xf32>
    %143 = arith.addf %141, %142 : vector<8x32xf32>
    %c0_49 = arith.constant 0 : index
    %c32_50 = arith.constant 32 : index
    %144 = vector.load %arg3[%c0_49, %c32_50] : memref<8x64xf32, #tpu.memory_space<vmem>>, vector<8x32xf32>
    %c0_51 = arith.constant 0 : index
    %c32_52 = arith.constant 32 : index
    %145 = vector.load %arg6[%c0_51, %c32_52] : memref<8x64xf32, #tpu.memory_space<vmem>>, vector<8x32xf32>
    %146 = arith.addf %144, %145 : vector<8x32xf32>
    %c0_53 = arith.constant 0 : index
    %c32_54 = arith.constant 32 : index
    %147 = vector.load %arg4[%c0_53, %c32_54] : memref<8x64xf32, #tpu.memory_space<vmem>>, vector<8x32xf32>
    %148 = vector.extract_strided_slice %0 {offsets = [0, 0, 0], sizes = [1, 32, 32], strides = [1, 1, 1]} : vector<4x32x32xf32> to vector<1x32x32xf32>
    %149 = vector.shape_cast %148 : vector<1x32x32xf32> to vector<32x32xf32>
    %cst_55 = arith.constant dense<0.000000e+00> : vector<8x32xf32>
    %150 = tpu.matmul %143, %149, %cst_55 {dimension_numbers = #tpu.dot_dimension_numbers<[1], [0], [0], [1], [0, 0, 1, 1], [], []>} : vector<8x32xf32>, vector<32x32xf32>, vector<8x32xf32> -> vector<8x32xf32>
    %151 = vector.broadcast %2 : vector<1x32xf32> to vector<8x32xf32>
    %152 = arith.addf %150, %151 : vector<8x32xf32>
    %153 = vector.extract_strided_slice %0 {offsets = [1, 0, 0], sizes = [1, 32, 32], strides = [1, 1, 1]} : vector<4x32x32xf32> to vector<1x32x32xf32>
    %154 = vector.shape_cast %153 : vector<1x32x32xf32> to vector<32x32xf32>
    %cst_56 = arith.constant dense<0.000000e+00> : vector<8x32xf32>
    %155 = tpu.matmul %146, %154, %cst_56 {dimension_numbers = #tpu.dot_dimension_numbers<[1], [0], [0], [1], [0, 0, 1, 1], [], []>} : vector<8x32xf32>, vector<32x32xf32>, vector<8x32xf32> -> vector<8x32xf32>
    %156 = vector.broadcast %3 : vector<1x32xf32> to vector<8x32xf32>
    %157 = arith.addf %155, %156 : vector<8x32xf32>
    %158 = vector.extract_strided_slice %0 {offsets = [2, 0, 0], sizes = [1, 32, 32], strides = [1, 1, 1]} : vector<4x32x32xf32> to vector<1x32x32xf32>
    %159 = vector.shape_cast %158 : vector<1x32x32xf32> to vector<32x32xf32>
    %cst_57 = arith.constant dense<0.000000e+00> : vector<8x32xf32>
    %160 = tpu.matmul %147, %159, %cst_57 {dimension_numbers = #tpu.dot_dimension_numbers<[1], [0], [0], [1], [0, 0, 1, 1], [], []>} : vector<8x32xf32>, vector<32x32xf32>, vector<8x32xf32> -> vector<8x32xf32>
    %161 = vector.broadcast %4 : vector<1x32xf32> to vector<8x32xf32>
    %162 = arith.addf %160, %161 : vector<8x32xf32>
    %163 = tpu.transpose %152, [1, 0] : vector<8x32xf32> -> vector<32x8xf32>
    %164 = tpu.transpose %157, [1, 0] : vector<8x32xf32> -> vector<32x8xf32>
    %165 = tpu.transpose %162, [1, 0] : vector<8x32xf32> -> vector<32x8xf32>
    %166 = vector.extract_strided_slice %163 {offsets = [0, 0], sizes = [8, 8], strides = [1, 1]} : vector<32x8xf32> to vector<8x8xf32>
    %167 = vector.extract_strided_slice %164 {offsets = [0, 0], sizes = [8, 8], strides = [1, 1]} : vector<32x8xf32> to vector<8x8xf32>
    %cst_58 = arith.constant dense<0.000000e+00> : vector<8x8xf32>
    %168 = tpu.matmul %166, %167, %cst_58 {dimension_numbers = #tpu.dot_dimension_numbers<[0], [0], [1], [1], [0, 1, 1, 1], [], []>} : vector<8x8xf32>, vector<8x8xf32>, vector<8x8xf32> -> vector<8x8xf32>
    %cst_59 = arith.constant dense<0xFF800000> : vector<8xf32>
    %169 = vector.multi_reduction <maximumf>, %168, %cst_59 [1] : vector<8x8xf32> to vector<8xf32>
    %170 = vector.shape_cast %169 : vector<8xf32> to vector<8x1xf32>
    %171 = vector.broadcast %170 : vector<8x1xf32> to vector<8x8xf32>
    %172 = arith.subf %168, %171 : vector<8x8xf32>
    %173 = math.exp %172 : vector<8x8xf32>
    %cst_60 = arith.constant dense<0.000000e+00> : vector<8xf32>
    %174 = vector.multi_reduction <add>, %173, %cst_60 [1] : vector<8x8xf32> to vector<8xf32>
    %175 = vector.shape_cast %174 : vector<8xf32> to vector<8x1xf32>
    %176 = tpu.reciprocal %175 {approx = true} : vector<8x1xf32> -> vector<8x1xf32>
    %177 = arith.mulf %175, %176 : vector<8x1xf32>
    %cst_61 = arith.constant 2.000000e+00 : f32
    %178 = vector.broadcast %cst_61 : f32 to vector<8x1xf32>
    %179 = arith.subf %178, %177 : vector<8x1xf32>
    %180 = arith.mulf %176, %179 : vector<8x1xf32>
    %181 = vector.broadcast %180 : vector<8x1xf32> to vector<8x8xf32>
    %182 = arith.mulf %173, %181 : vector<8x8xf32>
    %183 = vector.extract_strided_slice %165 {offsets = [0, 0], sizes = [8, 8], strides = [1, 1]} : vector<32x8xf32> to vector<8x8xf32>
    %cst_62 = arith.constant dense<0.000000e+00> : vector<8x8xf32>
    %184 = tpu.matmul %183, %182, %cst_62 {dimension_numbers = #tpu.dot_dimension_numbers<[1], [1], [0], [0], [0, 0, 1, 0], [], []>} : vector<8x8xf32>, vector<8x8xf32>, vector<8x8xf32> -> vector<8x8xf32>
    %185 = vector.extract_strided_slice %163 {offsets = [8, 0], sizes = [8, 8], strides = [1, 1]} : vector<32x8xf32> to vector<8x8xf32>
    %186 = vector.extract_strided_slice %164 {offsets = [8, 0], sizes = [8, 8], strides = [1, 1]} : vector<32x8xf32> to vector<8x8xf32>
    %cst_63 = arith.constant dense<0.000000e+00> : vector<8x8xf32>
    %187 = tpu.matmul %185, %186, %cst_63 {dimension_numbers = #tpu.dot_dimension_numbers<[0], [0], [1], [1], [0, 1, 1, 1], [], []>} : vector<8x8xf32>, vector<8x8xf32>, vector<8x8xf32> -> vector<8x8xf32>
    %cst_64 = arith.constant dense<0xFF800000> : vector<8xf32>
    %188 = vector.multi_reduction <maximumf>, %187, %cst_64 [1] : vector<8x8xf32> to vector<8xf32>
    %189 = vector.shape_cast %188 : vector<8xf32> to vector<8x1xf32>
    %190 = vector.broadcast %189 : vector<8x1xf32> to vector<8x8xf32>
    %191 = arith.subf %187, %190 : vector<8x8xf32>
    %192 = math.exp %191 : vector<8x8xf32>
    %cst_65 = arith.constant dense<0.000000e+00> : vector<8xf32>
    %193 = vector.multi_reduction <add>, %192, %cst_65 [1] : vector<8x8xf32> to vector<8xf32>
    %194 = vector.shape_cast %193 : vector<8xf32> to vector<8x1xf32>
    %195 = tpu.reciprocal %194 {approx = true} : vector<8x1xf32> -> vector<8x1xf32>
    %196 = arith.mulf %194, %195 : vector<8x1xf32>
    %cst_66 = arith.constant 2.000000e+00 : f32
    %197 = vector.broadcast %cst_66 : f32 to vector<8x1xf32>
    %198 = arith.subf %197, %196 : vector<8x1xf32>
    %199 = arith.mulf %195, %198 : vector<8x1xf32>
    %200 = vector.broadcast %199 : vector<8x1xf32> to vector<8x8xf32>
    %201 = arith.mulf %192, %200 : vector<8x8xf32>
    %202 = vector.extract_strided_slice %165 {offsets = [8, 0], sizes = [8, 8], strides = [1, 1]} : vector<32x8xf32> to vector<8x8xf32>
    %cst_67 = arith.constant dense<0.000000e+00> : vector<8x8xf32>
    %203 = tpu.matmul %202, %201, %cst_67 {dimension_numbers = #tpu.dot_dimension_numbers<[1], [1], [0], [0], [0, 0, 1, 0], [], []>} : vector<8x8xf32>, vector<8x8xf32>, vector<8x8xf32> -> vector<8x8xf32>
    %204 = vector.extract_strided_slice %163 {offsets = [16, 0], sizes = [8, 8], strides = [1, 1]} : vector<32x8xf32> to vector<8x8xf32>
    %205 = vector.extract_strided_slice %164 {offsets = [16, 0], sizes = [8, 8], strides = [1, 1]} : vector<32x8xf32> to vector<8x8xf32>
    %cst_68 = arith.constant dense<0.000000e+00> : vector<8x8xf32>
    %206 = tpu.matmul %204, %205, %cst_68 {dimension_numbers = #tpu.dot_dimension_numbers<[0], [0], [1], [1], [0, 1, 1, 1], [], []>} : vector<8x8xf32>, vector<8x8xf32>, vector<8x8xf32> -> vector<8x8xf32>
    %cst_69 = arith.constant dense<0xFF800000> : vector<8xf32>
    %207 = vector.multi_reduction <maximumf>, %206, %cst_69 [1] : vector<8x8xf32> to vector<8xf32>
    %208 = vector.shape_cast %207 : vector<8xf32> to vector<8x1xf32>
    %209 = vector.broadcast %208 : vector<8x1xf32> to vector<8x8xf32>
    %210 = arith.subf %206, %209 : vector<8x8xf32>
    %211 = math.exp %210 : vector<8x8xf32>
    %cst_70 = arith.constant dense<0.000000e+00> : vector<8xf32>
    %212 = vector.multi_reduction <add>, %211, %cst_70 [1] : vector<8x8xf32> to vector<8xf32>
    %213 = vector.shape_cast %212 : vector<8xf32> to vector<8x1xf32>
    %214 = tpu.reciprocal %213 {approx = true} : vector<8x1xf32> -> vector<8x1xf32>
    %215 = arith.mulf %213, %214 : vector<8x1xf32>
    %cst_71 = arith.constant 2.000000e+00 : f32
    %216 = vector.broadcast %cst_71 : f32 to vector<8x1xf32>
    %217 = arith.subf %216, %215 : vector<8x1xf32>
    %218 = arith.mulf %214, %217 : vector<8x1xf32>
    %219 = vector.broadcast %218 : vector<8x1xf32> to vector<8x8xf32>
    %220 = arith.mulf %211, %219 : vector<8x8xf32>
    %221 = vector.extract_strided_slice %165 {offsets = [16, 0], sizes = [8, 8], strides = [1, 1]} : vector<32x8xf32> to vector<8x8xf32>
    %cst_72 = arith.constant dense<0.000000e+00> : vector<8x8xf32>
    %222 = tpu.matmul %221, %220, %cst_72 {dimension_numbers = #tpu.dot_dimension_numbers<[1], [1], [0], [0], [0, 0, 1, 0], [], []>} : vector<8x8xf32>, vector<8x8xf32>, vector<8x8xf32> -> vector<8x8xf32>
    %223 = vector.extract_strided_slice %163 {offsets = [24, 0], sizes = [8, 8], strides = [1, 1]} : vector<32x8xf32> to vector<8x8xf32>
    %224 = vector.extract_strided_slice %164 {offsets = [24, 0], sizes = [8, 8], strides = [1, 1]} : vector<32x8xf32> to vector<8x8xf32>
    %cst_73 = arith.constant dense<0.000000e+00> : vector<8x8xf32>
    %225 = tpu.matmul %223, %224, %cst_73 {dimension_numbers = #tpu.dot_dimension_numbers<[0], [0], [1], [1], [0, 1, 1, 1], [], []>} : vector<8x8xf32>, vector<8x8xf32>, vector<8x8xf32> -> vector<8x8xf32>
    %cst_74 = arith.constant dense<0xFF800000> : vector<8xf32>
    %226 = vector.multi_reduction <maximumf>, %225, %cst_74 [1] : vector<8x8xf32> to vector<8xf32>
    %227 = vector.shape_cast %226 : vector<8xf32> to vector<8x1xf32>
    %228 = vector.broadcast %227 : vector<8x1xf32> to vector<8x8xf32>
    %229 = arith.subf %225, %228 : vector<8x8xf32>
    %230 = math.exp %229 : vector<8x8xf32>
    %cst_75 = arith.constant dense<0.000000e+00> : vector<8xf32>
    %231 = vector.multi_reduction <add>, %230, %cst_75 [1] : vector<8x8xf32> to vector<8xf32>
    %232 = vector.shape_cast %231 : vector<8xf32> to vector<8x1xf32>
    %233 = tpu.reciprocal %232 {approx = true} : vector<8x1xf32> -> vector<8x1xf32>
    %234 = arith.mulf %232, %233 : vector<8x1xf32>
    %cst_76 = arith.constant 2.000000e+00 : f32
    %235 = vector.broadcast %cst_76 : f32 to vector<8x1xf32>
    %236 = arith.subf %235, %234 : vector<8x1xf32>
    %237 = arith.mulf %233, %236 : vector<8x1xf32>
    %238 = vector.broadcast %237 : vector<8x1xf32> to vector<8x8xf32>
    %239 = arith.mulf %230, %238 : vector<8x8xf32>
    %240 = vector.extract_strided_slice %165 {offsets = [24, 0], sizes = [8, 8], strides = [1, 1]} : vector<32x8xf32> to vector<8x8xf32>
    %cst_77 = arith.constant dense<0.000000e+00> : vector<8x8xf32>
    %241 = tpu.matmul %240, %239, %cst_77 {dimension_numbers = #tpu.dot_dimension_numbers<[1], [1], [0], [0], [0, 0, 1, 0], [], []>} : vector<8x8xf32>, vector<8x8xf32>, vector<8x8xf32> -> vector<8x8xf32>
    %242 = tpu.concatenate %184, %203, %222, %241 in 0 : vector<8x8xf32>, vector<8x8xf32>, vector<8x8xf32>, vector<8x8xf32> -> vector<32x8xf32>
    %243 = tpu.transpose %242, [1, 0] : vector<32x8xf32> -> vector<8x32xf32>
    %244 = vector.extract_strided_slice %0 {offsets = [3, 0, 0], sizes = [1, 32, 32], strides = [1, 1, 1]} : vector<4x32x32xf32> to vector<1x32x32xf32>
    %245 = vector.shape_cast %244 : vector<1x32x32xf32> to vector<32x32xf32>
    %cst_78 = arith.constant dense<0.000000e+00> : vector<8x32xf32>
    %246 = tpu.matmul %243, %245, %cst_78 {dimension_numbers = #tpu.dot_dimension_numbers<[1], [0], [0], [1], [0, 0, 1, 1], [], []>} : vector<8x32xf32>, vector<32x32xf32>, vector<8x32xf32> -> vector<8x32xf32>
    %247 = vector.broadcast %5 : vector<1x32xf32> to vector<8x32xf32>
    %248 = arith.addf %246, %247 : vector<8x32xf32>
    %c0_79 = arith.constant 0 : index
    %c32_80 = arith.constant 32 : index
    %249 = vector.load %arg1[%c0_79, %c32_80] : memref<8x64xf32, #tpu.memory_space<vmem>>, vector<8x32xf32>
    %250 = arith.addf %249, %248 : vector<8x32xf32>
    %cst_81 = arith.constant dense<0.000000e+00> : vector<8xf32>
    %251 = vector.multi_reduction <add>, %250, %cst_81 [1] : vector<8x32xf32> to vector<8xf32>
    %252 = vector.shape_cast %251 : vector<8xf32> to vector<8x1xf32>
    %cst_82 = arith.constant 3.200000e+01 : f32
    %253 = vector.broadcast %cst_82 : f32 to vector<8x1xf32>
    %254 = arith.divf %252, %253 : vector<8x1xf32>
    %255 = vector.broadcast %254 : vector<8x1xf32> to vector<8x32xf32>
    %256 = arith.subf %250, %255 : vector<8x32xf32>
    %257 = arith.mulf %256, %256 : vector<8x32xf32>
    %cst_83 = arith.constant dense<0.000000e+00> : vector<8xf32>
    %258 = vector.multi_reduction <add>, %257, %cst_83 [1] : vector<8x32xf32> to vector<8xf32>
    %259 = vector.shape_cast %258 : vector<8xf32> to vector<8x1xf32>
    %cst_84 = arith.constant 3.200000e+01 : f32
    %260 = vector.broadcast %cst_84 : f32 to vector<8x1xf32>
    %261 = arith.divf %259, %260 : vector<8x1xf32>
    %262 = vector.broadcast %254 : vector<8x1xf32> to vector<8x32xf32>
    %263 = arith.subf %250, %262 : vector<8x32xf32>
    %cst_85 = arith.constant 9.99999974E-6 : f32
    %264 = vector.broadcast %cst_85 : f32 to vector<8x1xf32>
    %265 = arith.addf %261, %264 : vector<8x1xf32>
    %266 = math.rsqrt %265 : vector<8x1xf32>
    %267 = vector.broadcast %266 : vector<8x1xf32> to vector<8x32xf32>
    %268 = arith.mulf %263, %267 : vector<8x32xf32>
    %269 = vector.broadcast %6 : vector<1x32xf32> to vector<8x32xf32>
    %270 = arith.mulf %268, %269 : vector<8x32xf32>
    %271 = vector.broadcast %7 : vector<1x32xf32> to vector<8x32xf32>
    %272 = arith.addf %270, %271 : vector<8x32xf32>
    %c0_86 = arith.constant 0 : index
    %c32_87 = arith.constant 32 : index
    %273 = vector.load %arg9[%c0_86, %c32_87] : memref<8x64xf32, #tpu.memory_space<vmem>>, vector<8x32xf32>
    tpu.vector_store %arg9[%c0_86, %c32_87], %272 {strides = array<i32>} : memref<8x64xf32, #tpu.memory_space<vmem>>, vector<8x32xf32>,
    return
  }
  func.func @transform_0(%arg0: i32) -> (i32, i32) {
    %c0_i32 = arith.constant 0 : i32
    %c0_i32_0 = arith.constant 0 : i32
    %c0_i32_1 = arith.constant 0 : i32
    return %c0_i32, %c0_i32_0 : i32, i32
  }
  func.func @transform_1(%arg0: i32) -> (i32, i32) {
    %c0_i32 = arith.constant 0 : i32
    %c0_i32_0 = arith.constant 0 : i32
    %c0_i32_1 = arith.constant 0 : i32
    return %c0_i32, %c0_i32_0 : i32, i32
  }
  func.func @transform_2(%arg0: i32) -> (i32, i32) {
    %c0_i32 = arith.constant 0 : i32
    %c0_i32_0 = arith.constant 0 : i32
    %c0_i32_1 = arith.constant 0 : i32
    return %c0_i32, %c0_i32_0 : i32, i32
  }
  func.func @transform_3(%arg0: i32) -> (i32, i32) {
    %c0_i32 = arith.constant 0 : i32
    %c0_i32_0 = arith.constant 0 : i32
    %c0_i32_1 = arith.constant 0 : i32
    return %c0_i32, %c0_i32_0 : i32, i32
  }
  func.func @transform_4(%arg0: i32) -> (i32, i32) {
    %c0_i32 = arith.constant 0 : i32
    %c0_i32_0 = arith.constant 0 : i32
    %c0_i32_1 = arith.constant 0 : i32
    return %c0_i32, %c0_i32_0 : i32, i32
  }
  func.func @transform_5(%arg0: i32) -> (i32, i32) {
    %c0_i32 = arith.constant 0 : i32
    %c0_i32_0 = arith.constant 0 : i32
    %c0_i32_1 = arith.constant 0 : i32
    return %c0_i32, %c0_i32_0 : i32, i32
  }
  func.func @transform_6(%arg0: i32) -> (i32, i32, i32) {
    %c0_i32 = arith.constant 0 : i32
    %c0_i32_0 = arith.constant 0 : i32
    %c0_i32_1 = arith.constant 0 : i32
    %c0_i32_2 = arith.constant 0 : i32
    return %c0_i32, %c0_i32_0, %c0_i32_1 : i32, i32, i32
  }
  func.func @transform_7(%arg0: i32) -> (i32, i32) {
    %c0_i32 = arith.constant 0 : i32
    %c0_i32_0 = arith.constant 0 : i32
    %c0_i32_1 = arith.constant 0 : i32
    return %c0_i32, %c0_i32_0 : i32, i32
  }
  func.func @transform_8(%arg0: i32) -> (i32, i32) {
    %c0_i32 = arith.constant 0 : i32
    %c0_i32_0 = arith.constant 0 : i32
    %c0_i32_1 = arith.constant 0 : i32
    return %c0_i32, %c0_i32_0 : i32, i32
  }
}

</mosaic_0001>

<llo_original>
// kernel: tpu_custom_call.1
$region0: #{tpu_custom_call.1}
  #allocation0 [shape = 'u32[]', space=smem, size = 0x4, offset = 0x4, fixed_abs, tag = 'smem constant byte address 0x4 - core index']
  #allocation1 [shape = 'u32[72,128]{1,0:T(1,128)}', space=vmem, size = 0x9000, scoped, tag = 'internal scratch']
  %s0 = inlined_call_operand.hbm [shape: f32[8,64], index: 0, kind: input, shape index: {}]
  %s1 = inlined_call_operand.hbm [shape: f32[8,64], index: 1, kind: input, shape index: {}]
  %s2 = inlined_call_operand.hbm [shape: f32[8,64], index: 2, kind: input, shape index: {}]
  %s3 = inlined_call_operand.hbm [shape: f32[8,64], index: 3, kind: input, shape index: {}]
  %s4 = inlined_call_operand.hbm [shape: f32[8,64], index: 4, kind: input, shape index: {}]
  %s5 = inlined_call_operand.hbm [shape: f32[8,64], index: 5, kind: input, shape index: {}]
  %s6 = inlined_call_operand.hbm [shape: f32[4,32,32], index: 6, kind: input, shape index: {}]
  %s7 = inlined_call_operand.hbm [shape: f32[8,32], index: 7, kind: input, shape index: {}]
  %s8 = inlined_call_operand.hbm [shape: f32[8,64], index: 8, kind: output, shape index: {}]
  %s9 = sld [smem:[#allocation0]]
  $region74: #{tpu_custom_call.1} parent=0
    _
  %s11 = ssub.s32 1, %s9
  %s12 = scalar_select 0, %s11, %s9
  $region1: #{tpu_custom_call.1} parent=0
    #allocation2 [shape = 'u8[4096]{0}', space=vmem, size = 0x1000, scoped, tag = 'input window, operand 0, single buffered']
    #allocation3 [shape = 's32[1]{0}', space=sflag, size = 0x4, scoped, tag = 'scoped memory for tpu_custom_call.1']
    #allocation4 [shape = 's32[1]{0}', space=sflag, size = 0x4, scoped, tag = 'scoped memory for tpu_custom_call.1']
    #allocation5 [shape = 'u8[4096]{0}', space=vmem, size = 0x1000, scoped, tag = 'input window, operand 1, single buffered']
    #allocation6 [shape = 's32[1]{0}', space=sflag, size = 0x4, scoped, tag = 'scoped memory for tpu_custom_call.1']
    #allocation7 [shape = 'u8[4096]{0}', space=vmem, size = 0x1000, scoped, tag = 'input window, operand 2, single buffered']
    #allocation8 [shape = 'u8[4096]{0}', space=vmem, size = 0x1000, scoped, tag = 'input window, operand 3, single buffered']
    #allocation9 [shape = 's32[1]{0}', space=sflag, size = 0x4, scoped, tag = 'scoped memory for tpu_custom_call.1']
    #allocation10 [shape = 'u8[4096]{0}', space=vmem, size = 0x1000, scoped, tag = 'input window, operand 4, single buffered']
    #allocation11 [shape = 'u8[4096]{0}', space=vmem, size = 0x1000, scoped, tag = 'input window, operand 5, single buffered']
    #allocation12 [shape = 's32[1]{0}', space=sflag, size = 0x4, scoped, tag = 'scoped memory for tpu_custom_call.1']
    #allocation13 [shape = 'u8[65536]{0}', space=vmem, size = 0x10000, scoped, tag = 'input window, operand 6, single buffered']
    #allocation14 [shape = 'u8[4096]{0}', space=vmem, size = 0x1000, scoped, tag = 'input window, operand 7, single buffered']
    #allocation15 [shape = 's32[1]{0}', space=sflag, size = 0x4, scoped, tag = 'scoped memory for tpu_custom_call.1']
    #allocation16 [shape = 'u8[4096]{0}', space=vmem, size = 0x1000, scoped, tag = 'output window, operand 0, single buffered']
    %13 = vsyncpa [#allocation3], 0
    %14 = vsyncpa [#allocation6], 0
    %15 = vsyncpa [#allocation9], 0
    %16 = vsyncpa [#allocation12], 0
    %17 = vsyncpa [#allocation15], 0
    %18 = vsyncpa [#allocation4], 0
    // Predicated region
    $region2: #{tpu_custom_call.1} parent=1 // pred_check
      _
    $region3: #{tpu_custom_call.1} parent=1 // pred_check_branch
      %20 = sbr.rel (0) target = $region5
    $region4: #{tpu_custom_call.1} parent=1 // pred_region
      %22 = vsyncadd [#allocation3], 0
      %s24 = sshll.u32 %s0, 4
      %s25 = int_to_ptr.hbm [resolvable:$true] %s24
      %s26 = sshll.u32 [#allocation2], 4
      %s27 = int_to_ptr.vmem [resolvable:$true] %s26
      %29 = dma.hbm_to_vmem [thread:$0]  %s25, 128, %s27, [#allocation3]
    $region5: #{tpu_custom_call.1} parent=1 // pred_fallthru
      _
    // Predicated region
    $region6: #{tpu_custom_call.1} parent=1 // pred_check
      _
    $region7: #{tpu_custom_call.1} parent=1 // pred_check_branch
      %31 = sbr.rel (0) target = $region9
    $region8: #{tpu_custom_call.1} parent=1 // pred_region
      %33 = vsyncadd [#allocation6], 0
      %s35 = sshll.u32 %s1, 4
      %s36 = int_to_ptr.hbm [resolvable:$true] %s35
      %s37 = sshll.u32 [#allocation5], 4
      %s38 = int_to_ptr.vmem [resolvable:$true] %s37
      %40 = dma.hbm_to_vmem [thread:$0]  %s36, 128, %s38, [#allocation6]
    $region9: #{tpu_custom_call.1} parent=1 // pred_fallthru
      _
    // Predicated region
    $region10: #{tpu_custom_call.1} parent=1 // pred_check
      _
    $region11: #{tpu_custom_call.1} parent=1 // pred_check_branch
      %42 = sbr.rel (0) target = $region13
    $region12: #{tpu_custom_call.1} parent=1 // pred_region
      %44 = vsyncadd [#allocation6], 0
      %s46 = sshll.u32 %s2, 4
      %s47 = int_to_ptr.hbm [resolvable:$true] %s46
      %s48 = sshll.u32 [#allocation7], 4
      %s49 = int_to_ptr.vmem [resolvable:$true] %s48
      %51 = dma.hbm_to_vmem [thread:$0]  %s47, 128, %s49, [#allocation6]
    $region13: #{tpu_custom_call.1} parent=1 // pred_fallthru
      _
    // Predicated region
    $region14: #{tpu_custom_call.1} parent=1 // pred_check
      _
    $region15: #{tpu_custom_call.1} parent=1 // pred_check_branch
      %53 = sbr.rel (0) target = $region17
    $region16: #{tpu_custom_call.1} parent=1 // pred_region
      %55 = vsyncadd [#allocation9], 0
      %s57 = sshll.u32 %s3, 4
      %s58 = int_to_ptr.hbm [resolvable:$true] %s57
      %s59 = sshll.u32 [#allocation8], 4
      %s60 = int_to_ptr.vmem [resolvable:$true] %s59
      %62 = dma.hbm_to_vmem [thread:$0]  %s58, 128, %s60, [#allocation9]
    $region17: #{tpu_custom_call.1} parent=1 // pred_fallthru
      _
    // Predicated region
    $region18: #{tpu_custom_call.1} parent=1 // pred_check
      _
    $region19: #{tpu_custom_call.1} parent=1 // pred_check_branch
      %64 = sbr.rel (0) target = $region21
    $region20: #{tpu_custom_call.1} parent=1 // pred_region
      %66 = vsyncadd [#allocation9], 0
      %s68 = sshll.u32 %s4, 4
      %s69 = int_to_ptr.hbm [resolvable:$true] %s68
      %s70 = sshll.u32 [#allocation10], 4
      %s71 = int_to_ptr.vmem [resolvable:$true] %s70
      %73 = dma.hbm_to_vmem [thread:$0]  %s69, 128, %s71, [#allocation9]
    $region21: #{tpu_custom_call.1} parent=1 // pred_fallthru
      _
    // Predicated region
    $region22: #{tpu_custom_call.1} parent=1 // pred_check
      _
    $region23: #{tpu_custom_call.1} parent=1 // pred_check_branch
      %75 = sbr.rel (0) target = $region25
    $region24: #{tpu_custom_call.1} parent=1 // pred_region
      %77 = vsyncadd [#allocation12], 0
      %s79 = sshll.u32 %s5, 4
      %s80 = int_to_ptr.hbm [resolvable:$true] %s79
      %s81 = sshll.u32 [#allocation11], 4
      %s82 = int_to_ptr.vmem [resolvable:$true] %s81
      %84 = dma.hbm_to_vmem [thread:$0]  %s80, 128, %s82, [#allocation12]
    $region25: #{tpu_custom_call.1} parent=1 // pred_fallthru
      _
    // Predicated region
    $region26: #{tpu_custom_call.1} parent=1 // pred_check
      _
    $region27: #{tpu_custom_call.1} parent=1 // pred_check_branch
      %86 = sbr.rel (0) target = $region29
    $region28: #{tpu_custom_call.1} parent=1 // pred_region
      %88 = vsyncadd [#allocation12], 0
      %s89 = sshll.u32 %s6, 4
      %s90 = int_to_ptr.hbm [resolvable:$true] %s89
      %s91 = sshll.u32 [#allocation13], 4
      %s92 = int_to_ptr.vmem [resolvable:$true] %s91
      %97 = dma.hbm_to_vmem [thread:$0]  %s90, 2048, %s92, [#allocation12], 128, 128, 8
    $region29: #{tpu_custom_call.1} parent=1 // pred_fallthru
      _
    // Predicated region
    $region30: #{tpu_custom_call.1} parent=1 // pred_check
      _
    $region31: #{tpu_custom_call.1} parent=1 // pred_check_branch
      %99 = sbr.rel (0) target = $region33
    $region32: #{tpu_custom_call.1} parent=1 // pred_region
      %101 = vsyncadd [#allocation15], 0
      %s103 = sshll.u32 %s7, 4
      %s104 = int_to_ptr.hbm [resolvable:$true] %s103
      %s105 = sshll.u32 [#allocation14], 4
      %s106 = int_to_ptr.vmem [resolvable:$true] %s105
      %108 = dma.hbm_to_vmem [thread:$0]  %s104, 128, %s106, [#allocation15]
    $region33: #{tpu_custom_call.1} parent=1 // pred_fallthru
      _
    // Predicated region
    $region34: #{tpu_custom_call.1} parent=1 // pred_check
      _
    $region35: #{tpu_custom_call.1} parent=1 // pred_check_branch
      %110 = sbr.rel (0) target = $region37
    $region36: #{tpu_custom_call.1} parent=1 // pred_region
      %112 = dma.done [#allocation3], 128
    $region37: #{tpu_custom_call.1} parent=1 // pred_fallthru
      _
    // Predicated region
    $region38: #{tpu_custom_call.1} parent=1 // pred_check
      _
    $region39: #{tpu_custom_call.1} parent=1 // pred_check_branch
      %114 = sbr.rel (0) target = $region41
    $region40: #{tpu_custom_call.1} parent=1 // pred_region
      %116 = dma.done [#allocation6], 128
    $region41: #{tpu_custom_call.1} parent=1 // pred_fallthru
      _
    // Predicated region
    $region42: #{tpu_custom_call.1} parent=1 // pred_check
      _
    $region43: #{tpu_custom_call.1} parent=1 // pred_check_branch
      %118 = sbr.rel (0) target = $region45
    $region44: #{tpu_custom_call.1} parent=1 // pred_region
      %120 = dma.done [#allocation6], 128
    $region45: #{tpu_custom_call.1} parent=1 // pred_fallthru
      _
    // Predicated region
    $region46: #{tpu_custom_call.1} parent=1 // pred_check
      _
    $region47: #{tpu_custom_call.1} parent=1 // pred_check_branch
      %122 = sbr.rel (0) target = $region49
    $region48: #{tpu_custom_call.1} parent=1 // pred_region
      %124 = dma.done [#allocation9], 128
    $region49: #{tpu_custom_call.1} parent=1 // pred_fallthru
      _
    // Predicated region
    $region50: #{tpu_custom_call.1} parent=1 // pred_check
      _
    $region51: #{tpu_custom_call.1} parent=1 // pred_check_branch
      %126 = sbr.rel (0) target = $region53
    $region52: #{tpu_custom_call.1} parent=1 // pred_region
      %128 = dma.done [#allocation9], 128
    $region53: #{tpu_custom_call.1} parent=1 // pred_fallthru
      _
    // Predicated region
    $region54: #{tpu_custom_call.1} parent=1 // pred_check
      _
    $region55: #{tpu_custom_call.1} parent=1 // pred_check_branch
      %130 = sbr.rel (0) target = $region57
    $region56: #{tpu_custom_call.1} parent=1 // pred_region
      %132 = dma.done [#allocation12], 128
    $region57: #{tpu_custom_call.1} parent=1 // pred_fallthru
      _
    // Predicated region
    $region58: #{tpu_custom_call.1} parent=1 // pred_check
      _
    $region59: #{tpu_custom_call.1} parent=1 // pred_check_branch
      %134 = sbr.rel (0) target = $region61
    $region60: #{tpu_custom_call.1} parent=1 // pred_region
      %136 = dma.done [#allocation12], 2048
    $region61: #{tpu_custom_call.1} parent=1 // pred_fallthru
      _
    // Predicated region
    $region62: #{tpu_custom_call.1} parent=1 // pred_check
      _
    $region63: #{tpu_custom_call.1} parent=1 // pred_check_branch
      %138 = sbr.rel (0) target = $region65
    $region64: #{tpu_custom_call.1} parent=1 // pred_region
      %140 = dma.done [#allocation15], 128
    $region65: #{tpu_custom_call.1} parent=1 // pred_fallthru
      _
    %v141 = vld [vmem:[#allocation13] sm:$0xff]
    %v142 = vld [vmem:[#allocation13 + $0x8] sm:$0xff]
    %v143 = vld [vmem:[#allocation13 + $0x10] sm:$0xff]
    %v144 = vld [vmem:[#allocation13 + $0x18] sm:$0xff]
    %v145 = vld [vmem:[#allocation13 + $0x20] sm:$0xff]
    %v146 = vld [vmem:[#allocation13 + $0x28] sm:$0xff]
    %v147 = vld [vmem:[#allocation13 + $0x30] sm:$0xff]
    %v148 = vld [vmem:[#allocation13 + $0x38] sm:$0xff]
    %v149 = vld [vmem:[#allocation13 + $0x40] sm:$0xff]
    %v150 = vld [vmem:[#allocation13 + $0x48] sm:$0xff]
    %v151 = vld [vmem:[#allocation13 + $0x50] sm:$0xff]
    %v152 = vld [vmem:[#allocation13 + $0x58] sm:$0xff]
    %v153 = vld [vmem:[#allocation13 + $0x60] sm:$0xff]
    %v154 = vld [vmem:[#allocation13 + $0x68] sm:$0xff]
    %v155 = vld [vmem:[#allocation13 + $0x70] sm:$0xff]
    %v156 = vld [vmem:[#allocation13 + $0x78] sm:$0xff]
    %v157 = vld [vmem:[#allocation14] sm:$0xff]
    %v158 = vld [vmem:[#allocation5] sm:$0xff]
    %v159 = vld [vmem:[#allocation10] sm:$0xff]
    %v160 = vadd.f32 %v158, %v159
    %v161 = vld [vmem:[#allocation7] sm:$0xff]
    %v162 = vld [vmem:[#allocation11] sm:$0xff]
    %v163 = vadd.f32 %v161, %v162
    %v164 = vld [vmem:[#allocation8] sm:$0xff]
    %v165 = vperm.slane %v157, 0
    %vm166 = vcmask 261120
    %v168 = vsel %vm166, %v160, 0
    %170 = vmatpush.msra.mxu0 0.0
    %171 = vmatpush.msra.mxu0 0.0
    %172 = vmatpush.msra.mxu0 0.0
    %173 = vmatpush.msra.mxu0 0.0
    %174 = vmatpush.msra.mxu0 0.0
    %175 = vmatpush.msra.mxu0 0.0
    %176 = vmatpush.msra.mxu0 0.0
    %177 = vmatpush.msra.mxu0 0.0
    %178 = vmatpush.msra.mxu0 0.0
    %179 = vmatpush.msra.mxu0 0.0
    %180 = vmatpush.msra.mxu0 0.0
    %181 = vmatpush.msra.mxu0 0.0
    %182 = vmatpush.msra.mxu0 %v144
    %183 = vmatpush.msra.mxu0 %v143
    %184 = vmatpush.msra.mxu0 %v142
    %185 = vmatpush.msra.mxu0 %v141
    %186 = vmatmul.f32.gmra.mxu0 %v168
    %v187 = vpop.f32.mrf.mxu0
    %v188 = vadd.f32 %v165, %v187
    %189 = vdwg.mxu0
    %v190 = vperm.slane %v157, 1
    %v192 = vsel %vm166, %v163, 0
    %194 = vmatpush.msra.mxu0 0.0
    %195 = vmatpush.msra.mxu0 0.0
    %196 = vmatpush.msra.mxu0 0.0
    %197 = vmatpush.msra.mxu0 0.0
    %198 = vmatpush.msra.mxu0 0.0
    %199 = vmatpush.msra.mxu0 0.0
    %200 = vmatpush.msra.mxu0 0.0
    %201 = vmatpush.msra.mxu0 0.0
    %202 = vmatpush.msra.mxu0 0.0
    %203 = vmatpush.msra.mxu0 0.0
    %204 = vmatpush.msra.mxu0 0.0
    %205 = vmatpush.msra.mxu0 0.0
    %206 = vmatpush.msra.mxu0 %v148
    %207 = vmatpush.msra.mxu0 %v147
    %208 = vmatpush.msra.mxu0 %v146
    %209 = vmatpush.msra.mxu0 %v145
    %210 = vmatmul.f32.gmra.mxu0 %v192
    %v211 = vpop.f32.mrf.mxu0
    %v212 = vadd.f32 %v190, %v211
    %213 = vdwg.mxu0
    %v214 = vperm.slane %v157, 2
    %v216 = vsel %vm166, %v164, 0
    %218 = vmatpush.msra.mxu0 0.0
    %219 = vmatpush.msra.mxu0 0.0
    %220 = vmatpush.msra.mxu0 0.0
    %221 = vmatpush.msra.mxu0 0.0
    %222 = vmatpush.msra.mxu0 0.0
    %223 = vmatpush.msra.mxu0 0.0
    %224 = vmatpush.msra.mxu0 0.0
    %225 = vmatpush.msra.mxu0 0.0
    %226 = vmatpush.msra.mxu0 0.0
    %227 = vmatpush.msra.mxu0 0.0
    %228 = vmatpush.msra.mxu0 0.0
    %229 = vmatpush.msra.mxu0 0.0
    %230 = vmatpush.msra.mxu0 %v152
    %231 = vmatpush.msra.mxu0 %v151
    %232 = vmatpush.msra.mxu0 %v150
    %233 = vmatpush.msra.mxu0 %v149
    %234 = vmatmul.f32.gmra.mxu0 %v216
    %v235 = vpop.f32.mrf.mxu0
    %v236 = vadd.f32 %v214, %v235
    %237 = vdwg.mxu0
    %238 = vxpose.xlu0.b32.start [1/16] %v188, 128
    %239 = vxpose.xlu0.b32.cont [2/16] 0.0, 128
    %240 = vxpose.xlu0.b32.cont [3/16] 0.0, 128
    %241 = vxpose.xlu0.b32.cont [4/16] 0.0, 128
    %242 = vxpose.xlu0.b32.cont [5/16] 0.0, 128
    %243 = vxpose.xlu0.b32.cont [6/16] 0.0, 128
    %244 = vxpose.xlu0.b32.cont [7/16] 0.0, 128
    %245 = vxpose.xlu0.b32.cont [8/16] 0.0, 128
    %246 = vxpose.xlu0.b32.cont [9/16] 0.0, 128
    %247 = vxpose.xlu0.b32.cont [10/16] 0.0, 128
    %248 = vxpose.xlu0.b32.cont [11/16] 0.0, 128
    %249 = vxpose.xlu0.b32.cont [12/16] 0.0, 128
    %250 = vxpose.xlu0.b32.cont [13/16] 0.0, 128
    %251 = vxpose.xlu0.b32.cont [14/16] 0.0, 128
    %252 = vxpose.xlu0.b32.cont [15/16] 0.0, 128
    %253 = vxpose.xlu0.b32.end [16/16] 0.0, 128
    %v254 = vpop.trf.xlu0
    %v255 = vpop.trf.xlu0
    %v256 = vpop.trf.xlu0
    %v257 = vpop.trf.xlu0
    %v258 = vpop.trf.xlu0
    %v259 = vpop.trf.xlu0
    %v260 = vpop.trf.xlu0
    %v261 = vpop.trf.xlu0
    %v262 = vpop.trf.xlu0
    %v263 = vpop.trf.xlu0
    %v264 = vpop.trf.xlu0
    %v265 = vpop.trf.xlu0
    %v266 = vpop.trf.xlu0
    %v267 = vpop.trf.xlu0
    %v268 = vpop.trf.xlu0
    %v269 = vpop.trf.xlu0
    %270 = vxpose.xlu0.b32.start [1/16] %v236, 128
    %271 = vxpose.xlu0.b32.cont [2/16] 0.0, 128
    %272 = vxpose.xlu0.b32.cont [3/16] 0.0, 128
    %273 = vxpose.xlu0.b32.cont [4/16] 0.0, 128
    %274 = vxpose.xlu0.b32.cont [5/16] 0.0, 128
    %275 = vxpose.xlu0.b32.cont [6/16] 0.0, 128
    %276 = vxpose.xlu0.b32.cont [7/16] 0.0, 128
    %277 = vxpose.xlu0.b32.cont [8/16] 0.0, 128
    %278 = vxpose.xlu0.b32.cont [9/16] 0.0, 128
    %279 = vxpose.xlu0.b32.cont [10/16] 0.0, 128
    %280 = vxpose.xlu0.b32.cont [11/16] 0.0, 128
    %281 = vxpose.xlu0.b32.cont [12/16] 0.0, 128
    %282 = vxpose.xlu0.b32.cont [13/16] 0.0, 128
    %283 = vxpose.xlu0.b32.cont [14/16] 0.0, 128
    %284 = vxpose.xlu0.b32.cont [15/16] 0.0, 128
    %285 = vxpose.xlu0.b32.end [16/16] 0.0, 128
    %v286 = vpop.trf.xlu0
    %v287 = vpop.trf.xlu0
    %v288 = vpop.trf.xlu0
    %v289 = vpop.trf.xlu0
    %v290 = vpop.trf.xlu0
    %v291 = vpop.trf.xlu0
    %v292 = vpop.trf.xlu0
    %v293 = vpop.trf.xlu0
    %v294 = vpop.trf.xlu0
    %v295 = vpop.trf.xlu0
    %v296 = vpop.trf.xlu0
    %v297 = vpop.trf.xlu0
    %v298 = vpop.trf.xlu0
    %v299 = vpop.trf.xlu0
    %v300 = vpop.trf.xlu0
    %v301 = vpop.trf.xlu0
    %302 = vxpose.xlu0.b32.start [1/16] %v254, 128
    %303 = vxpose.xlu0.b32.cont [2/16] 0.0, 128
    %304 = vxpose.xlu0.b32.cont [3/16] 0.0, 128
    %305 = vxpose.xlu0.b32.cont [4/16] 0.0, 128
    %306 = vxpose.xlu0.b32.cont [5/16] 0.0, 128
    %307 = vxpose.xlu0.b32.cont [6/16] 0.0, 128
    %308 = vxpose.xlu0.b32.cont [7/16] 0.0, 128
    %309 = vxpose.xlu0.b32.cont [8/16] 0.0, 128
    %310 = vxpose.xlu0.b32.cont [9/16] 0.0, 128
    %311 = vxpose.xlu0.b32.cont [10/16] 0.0, 128
    %312 = vxpose.xlu0.b32.cont [11/16] 0.0, 128
    %313 = vxpose.xlu0.b32.cont [12/16] 0.0, 128
    %314 = vxpose.xlu0.b32.cont [13/16] 0.0, 128
    %315 = vxpose.xlu0.b32.cont [14/16] 0.0, 128
    %316 = vxpose.xlu0.b32.cont [15/16] 0.0, 128
    %317 = vxpose.xlu0.b32.end [16/16] 0.0, 128
    %v318 = vpop.trf.xlu0
    %v319 = vpop.trf.xlu0
    %v320 = vpop.trf.xlu0
    %v321 = vpop.trf.xlu0
    %v322 = vpop.trf.xlu0
    %v323 = vpop.trf.xlu0
    %v324 = vpop.trf.xlu0
    %v325 = vpop.trf.xlu0
    %v326 = vpop.trf.xlu0
    %v327 = vpop.trf.xlu0
    %v328 = vpop.trf.xlu0
    %v329 = vpop.trf.xlu0
    %v330 = vpop.trf.xlu0
    %v331 = vpop.trf.xlu0
    %v332 = vpop.trf.xlu0
    %v333 = vpop.trf.xlu0
    %vm334 = vcmask 64512
    %v336 = vsel %vm334, %v318, 0
    %v339 = vsel %vm334, %v212, 0
    %341 = vmatpush.xpose.msra.mxu0 0.0
    %342 = vmatpush.xpose.msra.mxu0 0.0
    %343 = vmatpush.xpose.msra.mxu0 0.0
    %344 = vmatpush.xpose.msra.mxu0 0.0
    %345 = vmatpush.xpose.msra.mxu0 0.0
    %346 = vmatpush.xpose.msra.mxu0 0.0
    %347 = vmatpush.xpose.msra.mxu0 0.0
    %348 = vmatpush.xpose.msra.mxu0 0.0
    %349 = vmatpush.xpose.msra.mxu0 0.0
    %350 = vmatpush.xpose.msra.mxu0 0.0
    %351 = vmatpush.xpose.msra.mxu0 0.0
    %352 = vmatpush.xpose.msra.mxu0 0.0
    %353 = vmatpush.xpose.msra.mxu0 0.0
    %354 = vmatpush.xpose.msra.mxu0 0.0
    %355 = vmatpush.xpose.msra.mxu0 0.0
    %356 = vmatpush.xpose.msra.mxu0 %v339
    %357 = vmatmul.f32.gmra.mxu0 %v336
    %v358 = vpop.f32.mrf.mxu0
    %v359 = vadd.f32 0.0, %v358
    %360 = vdwg.mxu0
    %v361 = vsel %vm334, %v359, -inf
    %362 = vmax.xlane.f32.xlu0 %v361
    %v363 = vpop.xlane.xlu0 %362
    %v364 = vsub.f32 %v359, %v363
    %v365 = vmul.f32 %v364, 1.442695
    %v366 = vpow.pop %v365
    %v367 = vsel %vm334, %v366, 0.0
    %368 = vadd.xlane.f32.xlu0 %v367
    %v369 = vpop.xlane.xlu0 %368
    %v370 = vrcp.pop %v369
    %v371 = vmul.f32 %v369, %v370
    %v372 = vsub.f32 2.0, %v371
    %v373 = vmul.f32 %v370, %v372
    %v374 = vmul.f32 %v366, %v373
    %v376 = vsel %vm334, %v286, 0
    %v379 = vsel %vm334, %v374, 0
    %381 = vmatpush.xpose.msra.mxu0 0.0
    %382 = vmatpush.xpose.msra.mxu0 0.0
    %383 = vmatpush.xpose.msra.mxu0 0.0
    %384 = vmatpush.xpose.msra.mxu0 0.0
    %385 = vmatpush.xpose.msra.mxu0 0.0
    %386 = vmatpush.xpose.msra.mxu0 0.0
    %387 = vmatpush.xpose.msra.mxu0 0.0
    %388 = vmatpush.xpose.msra.mxu0 0.0
    %389 = vmatpush.xpose.msra.mxu0 0.0
    %390 = vmatpush.xpose.msra.mxu0 0.0
    %391 = vmatpush.xpose.msra.mxu0 0.0
    %392 = vmatpush.xpose.msra.mxu0 0.0
    %393 = vmatpush.xpose.msra.mxu0 0.0
    %394 = vmatpush.xpose.msra.mxu0 0.0
    %395 = vmatpush.xpose.msra.mxu0 0.0
    %396 = vmatpush.xpose.msra.mxu0 %v379
    %397 = vmatmul.f32.gmra.mxu0 %v376
    %v398 = vpop.f32.mrf.mxu0
    %v399 = vadd.f32 0.0, %v398
    %400 = vdwg.mxu0
    %401 = vxpose.xlu0.b32.start [1/16] %v255, 128
    %402 = vxpose.xlu0.b32.cont [2/16] 0.0, 128
    %403 = vxpose.xlu0.b32.cont [3/16] 0.0, 128
    %404 = vxpose.xlu0.b32.cont [4/16] 0.0, 128
    %405 = vxpose.xlu0.b32.cont [5/16] 0.0, 128
    %406 = vxpose.xlu0.b32.cont [6/16] 0.0, 128
    %407 = vxpose.xlu0.b32.cont [7/16] 0.0, 128
    %408 = vxpose.xlu0.b32.cont [8/16] 0.0, 128
    %409 = vxpose.xlu0.b32.cont [9/16] 0.0, 128
    %410 = vxpose.xlu0.b32.cont [10/16] 0.0, 128
    %411 = vxpose.xlu0.b32.cont [11/16] 0.0, 128
    %412 = vxpose.xlu0.b32.cont [12/16] 0.0, 128
    %413 = vxpose.xlu0.b32.cont [13/16] 0.0, 128
    %414 = vxpose.xlu0.b32.cont [14/16] 0.0, 128
    %415 = vxpose.xlu0.b32.cont [15/16] 0.0, 128
    %416 = vxpose.xlu0.b32.end [16/16] 0.0, 128
    %v417 = vpop.trf.xlu0
    %v418 = vpop.trf.xlu0
    %v419 = vpop.trf.xlu0
    %v420 = vpop.trf.xlu0
    %v421 = vpop.trf.xlu0
    %v422 = vpop.trf.xlu0
    %v423 = vpop.trf.xlu0
    %v424 = vpop.trf.xlu0
    %v425 = vpop.trf.xlu0
    %v426 = vpop.trf.xlu0
    %v427 = vpop.trf.xlu0
    %v428 = vpop.trf.xlu0
    %v429 = vpop.trf.xlu0
    %v430 = vpop.trf.xlu0
    %v431 = vpop.trf.xlu0
    %v432 = vpop.trf.xlu0
    %433 = vrot.lane.b32.xlu0 %v212, 120
    %v434 = vpop.permute.xlu0 %433
    %v436 = vsel %vm334, %v417, 0
    %v438 = vsel %vm334, %v434, 0
    %440 = vmatpush.xpose.msra.mxu0 0.0
    %441 = vmatpush.xpose.msra.mxu0 0.0
    %442 = vmatpush.xpose.msra.mxu0 0.0
    %443 = vmatpush.xpose.msra.mxu0 0.0
    %444 = vmatpush.xpose.msra.mxu0 0.0
    %445 = vmatpush.xpose.msra.mxu0 0.0
    %446 = vmatpush.xpose.msra.mxu0 0.0
    %447 = vmatpush.xpose.msra.mxu0 0.0
    %448 = vmatpush.xpose.msra.mxu0 0.0
    %449 = vmatpush.xpose.msra.mxu0 0.0
    %450 = vmatpush.xpose.msra.mxu0 0.0
    %451 = vmatpush.xpose.msra.mxu0 0.0
    %452 = vmatpush.xpose.msra.mxu0 0.0
    %453 = vmatpush.xpose.msra.mxu0 0.0
    %454 = vmatpush.xpose.msra.mxu0 0.0
    %455 = vmatpush.xpose.msra.mxu0 %v438
    %456 = vmatmul.f32.gmra.mxu0 %v436
    %v457 = vpop.f32.mrf.mxu0
    %v458 = vadd.f32 0.0, %v457
    %459 = vdwg.mxu0
    %v460 = vsel %vm334, %v458, -inf
    %461 = vmax.xlane.f32.xlu0 %v460
    %v462 = vpop.xlane.xlu0 %461
    %v463 = vsub.f32 %v458, %v462
    %v464 = vmul.f32 %v463, 1.442695
    %v465 = vpow.pop %v464
    %v466 = vsel %vm334, %v465, 0.0
    %467 = vadd.xlane.f32.xlu0 %v466
    %v468 = vpop.xlane.xlu0 %467
    %v469 = vrcp.pop %v468
    %v470 = vmul.f32 %v468, %v469
    %v471 = vsub.f32 2.0, %v470
    %v472 = vmul.f32 %v469, %v471
    %v473 = vmul.f32 %v465, %v472
    %v475 = vsel %vm334, %v287, 0
    %v478 = vsel %vm334, %v473, 0
    %480 = vmatpush.xpose.msra.mxu0 0.0
    %481 = vmatpush.xpose.msra.mxu0 0.0
    %482 = vmatpush.xpose.msra.mxu0 0.0
    %483 = vmatpush.xpose.msra.mxu0 0.0
    %484 = vmatpush.xpose.msra.mxu0 0.0
    %485 = vmatpush.xpose.msra.mxu0 0.0
    %486 = vmatpush.xpose.msra.mxu0 0.0
    %487 = vmatpush.xpose.msra.mxu0 0.0
    %488 = vmatpush.xpose.msra.mxu0 0.0
    %489 = vmatpush.xpose.msra.mxu0 0.0
    %490 = vmatpush.xpose.msra.mxu0 0.0
    %491 = vmatpush.xpose.msra.mxu0 0.0
    %492 = vmatpush.xpose.msra.mxu0 0.0
    %493 = vmatpush.xpose.msra.mxu0 0.0
    %494 = vmatpush.xpose.msra.mxu0 0.0
    %495 = vmatpush.xpose.msra.mxu0 %v478
    %496 = vmatmul.f32.gmra.mxu0 %v475
    %v497 = vpop.f32.mrf.mxu0
    %v498 = vadd.f32 0.0, %v497
    %499 = vdwg.mxu0
    %500 = vxpose.xlu0.b32.start [1/16] %v256, 128
    %501 = vxpose.xlu0.b32.cont [2/16] 0.0, 128
    %502 = vxpose.xlu0.b32.cont [3/16] 0.0, 128
    %503 = vxpose.xlu0.b32.cont [4/16] 0.0, 128
    %504 = vxpose.xlu0.b32.cont [5/16] 0.0, 128
    %505 = vxpose.xlu0.b32.cont [6/16] 0.0, 128
    %506 = vxpose.xlu0.b32.cont [7/16] 0.0, 128
    %507 = vxpose.xlu0.b32.cont [8/16] 0.0, 128
    %508 = vxpose.xlu0.b32.cont [9/16] 0.0, 128
    %509 = vxpose.xlu0.b32.cont [10/16] 0.0, 128
    %510 = vxpose.xlu0.b32.cont [11/16] 0.0, 128
    %511 = vxpose.xlu0.b32.cont [12/16] 0.0, 128
    %512 = vxpose.xlu0.b32.cont [13/16] 0.0, 128
    %513 = vxpose.xlu0.b32.cont [14/16] 0.0, 128
    %514 = vxpose.xlu0.b32.cont [15/16] 0.0, 128
    %515 = vxpose.xlu0.b32.end [16/16] 0.0, 128
    %v516 = vpop.trf.xlu0
    %v517 = vpop.trf.xlu0
    %v518 = vpop.trf.xlu0
    %v519 = vpop.trf.xlu0
    %v520 = vpop.trf.xlu0
    %v521 = vpop.trf.xlu0
    %v522 = vpop.trf.xlu0
    %v523 = vpop.trf.xlu0
    %v524 = vpop.trf.xlu0
    %v525 = vpop.trf.xlu0
    %v526 = vpop.trf.xlu0
    %v527 = vpop.trf.xlu0
    %v528 = vpop.trf.xlu0
    %v529 = vpop.trf.xlu0
    %v530 = vpop.trf.xlu0
    %v531 = vpop.trf.xlu0
    %532 = vrot.lane.b32.xlu0 %v212, 112
    %v533 = vpop.permute.xlu0 %532
    %v535 = vsel %vm334, %v516, 0
    %v537 = vsel %vm334, %v533, 0
    %539 = vmatpush.xpose.msra.mxu0 0.0
    %540 = vmatpush.xpose.msra.mxu0 0.0
    %541 = vmatpush.xpose.msra.mxu0 0.0
    %542 = vmatpush.xpose.msra.mxu0 0.0
    %543 = vmatpush.xpose.msra.mxu0 0.0
    %544 = vmatpush.xpose.msra.mxu0 0.0
    %545 = vmatpush.xpose.msra.mxu0 0.0
    %546 = vmatpush.xpose.msra.mxu0 0.0
    %547 = vmatpush.xpose.msra.mxu0 0.0
    %548 = vmatpush.xpose.msra.mxu0 0.0
    %549 = vmatpush.xpose.msra.mxu0 0.0
    %550 = vmatpush.xpose.msra.mxu0 0.0
    %551 = vmatpush.xpose.msra.mxu0 0.0
    %552 = vmatpush.xpose.msra.mxu0 0.0
    %553 = vmatpush.xpose.msra.mxu0 0.0
    %554 = vmatpush.xpose.msra.mxu0 %v537
    %555 = vmatmul.f32.gmra.mxu0 %v535
    %v556 = vpop.f32.mrf.mxu0
    %v557 = vadd.f32 0.0, %v556
    %558 = vdwg.mxu0
    %v559 = vsel %vm334, %v557, -inf
    %560 = vmax.xlane.f32.xlu0 %v559
    %v561 = vpop.xlane.xlu0 %560
    %v562 = vsub.f32 %v557, %v561
    %v563 = vmul.f32 %v562, 1.442695
    %v564 = vpow.pop %v563
    %v565 = vsel %vm334, %v564, 0.0
    %566 = vadd.xlane.f32.xlu0 %v565
    %v567 = vpop.xlane.xlu0 %566
    %v568 = vrcp.pop %v567
    %v569 = vmul.f32 %v567, %v568
    %v570 = vsub.f32 2.0, %v569
    %v571 = vmul.f32 %v568, %v570
    %v572 = vmul.f32 %v564, %v571
    %v574 = vsel %vm334, %v288, 0
    %v577 = vsel %vm334, %v572, 0
    %579 = vmatpush.xpose.msra.mxu0 0.0
    %580 = vmatpush.xpose.msra.mxu0 0.0
    %581 = vmatpush.xpose.msra.mxu0 0.0
    %582 = vmatpush.xpose.msra.mxu0 0.0
    %583 = vmatpush.xpose.msra.mxu0 0.0
    %584 = vmatpush.xpose.msra.mxu0 0.0
    %585 = vmatpush.xpose.msra.mxu0 0.0
    %586 = vmatpush.xpose.msra.mxu0 0.0
    %587 = vmatpush.xpose.msra.mxu0 0.0
    %588 = vmatpush.xpose.msra.mxu0 0.0
    %589 = vmatpush.xpose.msra.mxu0 0.0
    %590 = vmatpush.xpose.msra.mxu0 0.0
    %591 = vmatpush.xpose.msra.mxu0 0.0
    %592 = vmatpush.xpose.msra.mxu0 0.0
    %593 = vmatpush.xpose.msra.mxu0 0.0
    %594 = vmatpush.xpose.msra.mxu0 %v577
    %595 = vmatmul.f32.gmra.mxu0 %v574
    %v596 = vpop.f32.mrf.mxu0
    %v597 = vadd.f32 0.0, %v596
    %598 = vdwg.mxu0
    %599 = vxpose.xlu0.b32.start [1/16] %v257, 128
    %600 = vxpose.xlu0.b32.cont [2/16] 0.0, 128
    %601 = vxpose.xlu0.b32.cont [3/16] 0.0, 128
    %602 = vxpose.xlu0.b32.cont [4/16] 0.0, 128
    %603 = vxpose.xlu0.b32.cont [5/16] 0.0, 128
    %604 = vxpose.xlu0.b32.cont [6/16] 0.0, 128
    %605 = vxpose.xlu0.b32.cont [7/16] 0.0, 128
    %606 = vxpose.xlu0.b32.cont [8/16] 0.0, 128
    %607 = vxpose.xlu0.b32.cont [9/16] 0.0, 128
    %608 = vxpose.xlu0.b32.cont [10/16] 0.0, 128
    %609 = vxpose.xlu0.b32.cont [11/16] 0.0, 128
    %610 = vxpose.xlu0.b32.cont [12/16] 0.0, 128
    %611 = vxpose.xlu0.b32.cont [13/16] 0.0, 128
    %612 = vxpose.xlu0.b32.cont [14/16] 0.0, 128
    %613 = vxpose.xlu0.b32.cont [15/16] 0.0, 128
    %614 = vxpose.xlu0.b32.end [16/16] 0.0, 128
    %v615 = vpop.trf.xlu0
    %v616 = vpop.trf.xlu0
    %v617 = vpop.trf.xlu0
    %v618 = vpop.trf.xlu0
    %v619 = vpop.trf.xlu0
    %v620 = vpop.trf.xlu0
    %v621 = vpop.trf.xlu0
    %v622 = vpop.trf.xlu0
    %v623 = vpop.trf.xlu0
    %v624 = vpop.trf.xlu0
    %v625 = vpop.trf.xlu0
    %v626 = vpop.trf.xlu0
    %v627 = vpop.trf.xlu0
    %v628 = vpop.trf.xlu0
    %v629 = vpop.trf.xlu0
    %v630 = vpop.trf.xlu0
    %631 = vrot.lane.b32.xlu0 %v212, 104
    %v632 = vpop.permute.xlu0 %631
    %v634 = vsel %vm334, %v615, 0
    %v636 = vsel %vm334, %v632, 0
    %638 = vmatpush.xpose.msra.mxu0 0.0
    %639 = vmatpush.xpose.msra.mxu0 0.0
    %640 = vmatpush.xpose.msra.mxu0 0.0
    %641 = vmatpush.xpose.msra.mxu0 0.0
    %642 = vmatpush.xpose.msra.mxu0 0.0
    %643 = vmatpush.xpose.msra.mxu0 0.0
    %644 = vmatpush.xpose.msra.mxu0 0.0
    %645 = vmatpush.xpose.msra.mxu0 0.0
    %646 = vmatpush.xpose.msra.mxu0 0.0
    %647 = vmatpush.xpose.msra.mxu0 0.0
    %648 = vmatpush.xpose.msra.mxu0 0.0
    %649 = vmatpush.xpose.msra.mxu0 0.0
    %650 = vmatpush.xpose.msra.mxu0 0.0
    %651 = vmatpush.xpose.msra.mxu0 0.0
    %652 = vmatpush.xpose.msra.mxu0 0.0
    %653 = vmatpush.xpose.msra.mxu0 %v636
    %654 = vmatmul.f32.gmra.mxu0 %v634
    %v655 = vpop.f32.mrf.mxu0
    %v656 = vadd.f32 0.0, %v655
    %657 = vdwg.mxu0
    %v658 = vsel %vm334, %v656, -inf
    %659 = vmax.xlane.f32.xlu0 %v658
    %v660 = vpop.xlane.xlu0 %659
    %v661 = vsub.f32 %v656, %v660
    %v662 = vmul.f32 %v661, 1.442695
    %v663 = vpow.pop %v662
    %v664 = vsel %vm334, %v663, 0.0
    %665 = vadd.xlane.f32.xlu0 %v664
    %v666 = vpop.xlane.xlu0 %665
    %v667 = vrcp.pop %v666
    %v668 = vmul.f32 %v666, %v667
    %v669 = vsub.f32 2.0, %v668
    %v670 = vmul.f32 %v667, %v669
    %v671 = vmul.f32 %v663, %v670
    %v673 = vsel %vm334, %v289, 0
    %v676 = vsel %vm334, %v671, 0
    %678 = vmatpush.xpose.msra.mxu0 0.0
    %679 = vmatpush.xpose.msra.mxu0 0.0
    %680 = vmatpush.xpose.msra.mxu0 0.0
    %681 = vmatpush.xpose.msra.mxu0 0.0
    %682 = vmatpush.xpose.msra.mxu0 0.0
    %683 = vmatpush.xpose.msra.mxu0 0.0
    %684 = vmatpush.xpose.msra.mxu0 0.0
    %685 = vmatpush.xpose.msra.mxu0 0.0
    %686 = vmatpush.xpose.msra.mxu0 0.0
    %687 = vmatpush.xpose.msra.mxu0 0.0
    %688 = vmatpush.xpose.msra.mxu0 0.0
    %689 = vmatpush.xpose.msra.mxu0 0.0
    %690 = vmatpush.xpose.msra.mxu0 0.0
    %691 = vmatpush.xpose.msra.mxu0 0.0
    %692 = vmatpush.xpose.msra.mxu0 0.0
    %693 = vmatpush.xpose.msra.mxu0 %v676
    %694 = vmatmul.f32.gmra.mxu0 %v673
    %v695 = vpop.f32.mrf.mxu0
    %v696 = vadd.f32 0.0, %v695
    %697 = vdwg.mxu0
    %698 = vxpose.xlu0.b32.start [1/16] %v399, 128
    %699 = vxpose.xlu0.b32.cont [2/16] %v498, 128
    %700 = vxpose.xlu0.b32.cont [3/16] %v597, 128
    %701 = vxpose.xlu0.b32.cont [4/16] %v696, 128
    %702 = vxpose.xlu0.b32.cont [5/16] 0.0, 128
    %703 = vxpose.xlu0.b32.cont [6/16] 0.0, 128
    %704 = vxpose.xlu0.b32.cont [7/16] 0.0, 128
    %705 = vxpose.xlu0.b32.cont [8/16] 0.0, 128
    %706 = vxpose.xlu0.b32.cont [9/16] 0.0, 128
    %707 = vxpose.xlu0.b32.cont [10/16] 0.0, 128
    %708 = vxpose.xlu0.b32.cont [11/16] 0.0, 128
    %709 = vxpose.xlu0.b32.cont [12/16] 0.0, 128
    %710 = vxpose.xlu0.b32.cont [13/16] 0.0, 128
    %711 = vxpose.xlu0.b32.cont [14/16] 0.0, 128
    %712 = vxpose.xlu0.b32.cont [15/16] 0.0, 128
    %713 = vxpose.xlu0.b32.end [16/16] 0.0, 128
    %v714 = vpop.trf.xlu0
    %v715 = vpop.trf.xlu0
    %v716 = vpop.trf.xlu0
    %v717 = vpop.trf.xlu0
    %v718 = vpop.trf.xlu0
    %v719 = vpop.trf.xlu0
    %v720 = vpop.trf.xlu0
    %v721 = vpop.trf.xlu0
    %v722 = vpop.trf.xlu0
    %v723 = vpop.trf.xlu0
    %v724 = vpop.trf.xlu0
    %v725 = vpop.trf.xlu0
    %v726 = vpop.trf.xlu0
    %v727 = vpop.trf.xlu0
    %v728 = vpop.trf.xlu0
    %v729 = vpop.trf.xlu0
    %v730 = vperm.slane %v157, 3
    %v732 = vsel %vm166, %v714, 0
    %734 = vmatpush.msra.mxu0 0.0
    %735 = vmatpush.msra.mxu0 0.0
    %736 = vmatpush.msra.mxu0 0.0
    %737 = vmatpush.msra.mxu0 0.0
    %738 = vmatpush.msra.mxu0 0.0
    %739 = vmatpush.msra.mxu0 0.0
    %740 = vmatpush.msra.mxu0 0.0
    %741 = vmatpush.msra.mxu0 0.0
    %742 = vmatpush.msra.mxu0 0.0
    %743 = vmatpush.msra.mxu0 0.0
    %744 = vmatpush.msra.mxu0 0.0
    %745 = vmatpush.msra.mxu0 0.0
    %746 = vmatpush.msra.mxu0 %v156
    %747 = vmatpush.msra.mxu0 %v155
    %748 = vmatpush.msra.mxu0 %v154
    %749 = vmatpush.msra.mxu0 %v153
    %750 = vmatmul.f32.gmra.mxu0 %v732
    %v751 = vpop.f32.mrf.mxu0
    %v752 = vadd.f32 %v730, %v751
    %753 = vdwg.mxu0
    %v754 = vld [vmem:[#allocation2] sm:$0xff]
    %v755 = vadd.f32 %v754, %v752
    %v756 = vsel %vm166, %v755, 0.0
    %757 = vadd.xlane.f32.xlu0 %v756
    %v758 = vpop.xlane.xlu0 %757
    %v759 = vrcp.pop 32.0
    %v760 = vmul.f32 32.0, %v759
    %v761 = vsub.f32 1.0, %v760
    %v762 = vmul.f32 %v759, %v761
    %v763 = vadd.f32 %v759, %v762
    %vm764 = vweird.f32 %v759
    %v765 = vsel %vm764, %v759, %v763
    %v766 = vmul.f32 %v758, %v765
    %v767 = vsub.f32 %v755, %v766
    %v768 = vmul.f32 %v767, %v767
    %v769 = vsel %vm166, %v768, 0.0
    %770 = vadd.xlane.f32.xlu0 %v769
    %v771 = vpop.xlane.xlu0 %770
    %v772 = vmul.f32 %v771, %v765
    %v773 = vadd.f32 %v772, 1e-05
    %v774 = vrsqrt.pop %v773
    %v775 = vmul.f32 %v774, %v773
    %v776 = vmul.f32 %v775, %v774
    %v777 = vmul.f32 0.5, %v776
    %v778 = vsub.f32 1.5, %v777
    %v779 = vmul.f32 %v774, %v778
    %vm780 = vweird.f32 %v773
    %vm781 = vweird.f32 %v774
    %vm782 = vmor %vm780, %vm781
    %v783 = vsel %vm782, %v774, %v779
    %v784 = vmul.f32 %v767, %v783
    %v785 = vperm.slane %v157, 4
    %v786 = vmul.f32 %v784, %v785
    %v787 = vperm.slane %v157, 5
    %v788 = vadd.f32 %v786, %v787
    %789 = vst.msk [vmem:[#allocation16] sm:$0xff] %vm166, %v788
    %v790 = vld [vmem:[#allocation5] sm:$0xff]
    %v791 = vld [vmem:[#allocation10] sm:$0xff]
    %v792 = vadd.f32 %v790, %v791
    %v793 = vld [vmem:[#allocation7] sm:$0xff]
    %v794 = vld [vmem:[#allocation11] sm:$0xff]
    %v795 = vadd.f32 %v793, %v794
    %v796 = vld [vmem:[#allocation8] sm:$0xff]
    %798 = vrot.lane.b32.xlu0 %v792, 96
    %v799 = vpop.permute.xlu0 %798
    %v800 = vsel %vm166, %v799, 0
    %802 = vmatpush.msra.mxu0 0.0
    %803 = vmatpush.msra.mxu0 0.0
    %804 = vmatpush.msra.mxu0 0.0
    %805 = vmatpush.msra.mxu0 0.0
    %806 = vmatpush.msra.mxu0 0.0
    %807 = vmatpush.msra.mxu0 0.0
    %808 = vmatpush.msra.mxu0 0.0
    %809 = vmatpush.msra.mxu0 0.0
    %810 = vmatpush.msra.mxu0 0.0
    %811 = vmatpush.msra.mxu0 0.0
    %812 = vmatpush.msra.mxu0 0.0
    %813 = vmatpush.msra.mxu0 0.0
    %814 = vmatpush.msra.mxu0 %v144
    %815 = vmatpush.msra.mxu0 %v143
    %816 = vmatpush.msra.mxu0 %v142
    %817 = vmatpush.msra.mxu0 %v141
    %818 = vmatmul.f32.gmra.mxu0 %v800
    %v819 = vpop.f32.mrf.mxu0
    %v820 = vadd.f32 %v165, %v819
    %821 = vdwg.mxu0
    %823 = vrot.lane.b32.xlu0 %v795, 96
    %v824 = vpop.permute.xlu0 %823
    %v825 = vsel %vm166, %v824, 0
    %827 = vmatpush.msra.mxu0 0.0
    %828 = vmatpush.msra.mxu0 0.0
    %829 = vmatpush.msra.mxu0 0.0
    %830 = vmatpush.msra.mxu0 0.0
    %831 = vmatpush.msra.mxu0 0.0
    %832 = vmatpush.msra.mxu0 0.0
    %833 = vmatpush.msra.mxu0 0.0
    %834 = vmatpush.msra.mxu0 0.0
    %835 = vmatpush.msra.mxu0 0.0
    %836 = vmatpush.msra.mxu0 0.0
    %837 = vmatpush.msra.mxu0 0.0
    %838 = vmatpush.msra.mxu0 0.0
    %839 = vmatpush.msra.mxu0 %v148
    %840 = vmatpush.msra.mxu0 %v147
    %841 = vmatpush.msra.mxu0 %v146
    %842 = vmatpush.msra.mxu0 %v145
    %843 = vmatmul.f32.gmra.mxu0 %v825
    %v844 = vpop.f32.mrf.mxu0
    %v845 = vadd.f32 %v190, %v844
    %846 = vdwg.mxu0
    %848 = vrot.lane.b32.xlu0 %v796, 96
    %v849 = vpop.permute.xlu0 %848
    %v850 = vsel %vm166, %v849, 0
    %852 = vmatpush.msra.mxu0 0.0
    %853 = vmatpush.msra.mxu0 0.0
    %854 = vmatpush.msra.mxu0 0.0
    %855 = vmatpush.msra.mxu0 0.0
    %856 = vmatpush.msra.mxu0 0.0
    %857 = vmatpush.msra.mxu0 0.0
    %858 = vmatpush.msra.mxu0 0.0
    %859 = vmatpush.msra.mxu0 0.0
    %860 = vmatpush.msra.mxu0 0.0
    %861 = vmatpush.msra.mxu0 0.0
    %862 = vmatpush.msra.mxu0 0.0
    %863 = vmatpush.msra.mxu0 0.0
    %864 = vmatpush.msra.mxu0 %v152
    %865 = vmatpush.msra.mxu0 %v151
    %866 = vmatpush.msra.mxu0 %v150
    %867 = vmatpush.msra.mxu0 %v149
    %868 = vmatmul.f32.gmra.mxu0 %v850
    %v869 = vpop.f32.mrf.mxu0
    %v870 = vadd.f32 %v214, %v869
    %871 = vdwg.mxu0
    %872 = vxpose.xlu0.b32.start [1/16] %v820, 128
    %873 = vxpose.xlu0.b32.cont [2/16] 0.0, 128
    %874 = vxpose.xlu0.b32.cont [3/16] 0.0, 128
    %875 = vxpose.xlu0.b32.cont [4/16] 0.0, 128
    %876 = vxpose.xlu0.b32.cont [5/16] 0.0, 128
    %877 = vxpose.xlu0.b32.cont [6/16] 0.0, 128
    %878 = vxpose.xlu0.b32.cont [7/16] 0.0, 128
    %879 = vxpose.xlu0.b32.cont [8/16] 0.0, 128
    %880 = vxpose.xlu0.b32.cont [9/16] 0.0, 128
    %881 = vxpose.xlu0.b32.cont [10/16] 0.0, 128
    %882 = vxpose.xlu0.b32.cont [11/16] 0.0, 128
    %883 = vxpose.xlu0.b32.cont [12/16] 0.0, 128
    %884 = vxpose.xlu0.b32.cont [13/16] 0.0, 128
    %885 = vxpose.xlu0.b32.cont [14/16] 0.0, 128
    %886 = vxpose.xlu0.b32.cont [15/16] 0.0, 128
    %887 = vxpose.xlu0.b32.end [16/16] 0.0, 128
    %v888 = vpop.trf.xlu0
    %v889 = vpop.trf.xlu0
    %v890 = vpop.trf.xlu0
    %v891 = vpop.trf.xlu0
    %v892 = vpop.trf.xlu0
    %v893 = vpop.trf.xlu0
    %v894 = vpop.trf.xlu0
    %v895 = vpop.trf.xlu0
    %v896 = vpop.trf.xlu0
    %v897 = vpop.trf.xlu0
    %v898 = vpop.trf.xlu0
    %v899 = vpop.trf.xlu0
    %v900 = vpop.trf.xlu0
    %v901 = vpop.trf.xlu0
    %v902 = vpop.trf.xlu0
    %v903 = vpop.trf.xlu0
    %904 = vxpose.xlu0.b32.start [1/16] %v870, 128
    %905 = vxpose.xlu0.b32.cont [2/16] 0.0, 128
    %906 = vxpose.xlu0.b32.cont [3/16] 0.0, 128
    %907 = vxpose.xlu0.b32.cont [4/16] 0.0, 128
    %908 = vxpose.xlu0.b32.cont [5/16] 0.0, 128
    %909 = vxpose.xlu0.b32.cont [6/16] 0.0, 128
    %910 = vxpose.xlu0.b32.cont [7/16] 0.0, 128
    %911 = vxpose.xlu0.b32.cont [8/16] 0.0, 128
    %912 = vxpose.xlu0.b32.cont [9/16] 0.0, 128
    %913 = vxpose.xlu0.b32.cont [10/16] 0.0, 128
    %914 = vxpose.xlu0.b32.cont [11/16] 0.0, 128
    %915 = vxpose.xlu0.b32.cont [12/16] 0.0, 128
    %916 = vxpose.xlu0.b32.cont [13/16] 0.0, 128
    %917 = vxpose.xlu0.b32.cont [14/16] 0.0, 128
    %918 = vxpose.xlu0.b32.cont [15/16] 0.0, 128
    %919 = vxpose.xlu0.b32.end [16/16] 0.0, 128
    %v920 = vpop.trf.xlu0
    %v921 = vpop.trf.xlu0
    %v922 = vpop.trf.xlu0
    %v923 = vpop.trf.xlu0
    %v924 = vpop.trf.xlu0
    %v925 = vpop.trf.xlu0
    %v926 = vpop.trf.xlu0
    %v927 = vpop.trf.xlu0
    %v928 = vpop.trf.xlu0
    %v929 = vpop.trf.xlu0
    %v930 = vpop.trf.xlu0
    %v931 = vpop.trf.xlu0
    %v932 = vpop.trf.xlu0
    %v933 = vpop.trf.xlu0
    %v934 = vpop.trf.xlu0
    %v935 = vpop.trf.xlu0
    %936 = vxpose.xlu0.b32.start [1/16] %v888, 128
    %937 = vxpose.xlu0.b32.cont [2/16] 0.0, 128
    %938 = vxpose.xlu0.b32.cont [3/16] 0.0, 128
    %939 = vxpose.xlu0.b32.cont [4/16] 0.0, 128
    %940 = vxpose.xlu0.b32.cont [5/16] 0.0, 128
    %941 = vxpose.xlu0.b32.cont [6/16] 0.0, 128
    %942 = vxpose.xlu0.b32.cont [7/16] 0.0, 128
    %943 = vxpose.xlu0.b32.cont [8/16] 0.0, 128
    %944 = vxpose.xlu0.b32.cont [9/16] 0.0, 128
    %945 = vxpose.xlu0.b32.cont [10/16] 0.0, 128
    %946 = vxpose.xlu0.b32.cont [11/16] 0.0, 128
    %947 = vxpose.xlu0.b32.cont [12/16] 0.0, 128
    %948 = vxpose.xlu0.b32.cont [13/16] 0.0, 128
    %949 = vxpose.xlu0.b32.cont [14/16] 0.0, 128
    %950 = vxpose.xlu0.b32.cont [15/16] 0.0, 128
    %951 = vxpose.xlu0.b32.end [16/16] 0.0, 128
    %v952 = vpop.trf.xlu0
    %v953 = vpop.trf.xlu0
    %v954 = vpop.trf.xlu0
    %v955 = vpop.trf.xlu0
    %v956 = vpop.trf.xlu0
    %v957 = vpop.trf.xlu0
    %v958 = vpop.trf.xlu0
    %v959 = vpop.trf.xlu0
    %v960 = vpop.trf.xlu0
    %v961 = vpop.trf.xlu0
    %v962 = vpop.trf.xlu0
    %v963 = vpop.trf.xlu0
    %v964 = vpop.trf.xlu0
    %v965 = vpop.trf.xlu0
    %v966 = vpop.trf.xlu0
    %v967 = vpop.trf.xlu0
    %v969 = vsel %vm334, %v952, 0
    %v972 = vsel %vm334, %v845, 0
    %974 = vmatpush.xpose.msra.mxu0 0.0
    %975 = vmatpush.xpose.msra.mxu0 0.0
    %976 = vmatpush.xpose.msra.mxu0 0.0
    %977 = vmatpush.xpose.msra.mxu0 0.0
    %978 = vmatpush.xpose.msra.mxu0 0.0
    %979 = vmatpush.xpose.msra.mxu0 0.0
    %980 = vmatpush.xpose.msra.mxu0 0.0
    %981 = vmatpush.xpose.msra.mxu0 0.0
    %982 = vmatpush.xpose.msra.mxu0 0.0
    %983 = vmatpush.xpose.msra.mxu0 0.0
    %984 = vmatpush.xpose.msra.mxu0 0.0
    %985 = vmatpush.xpose.msra.mxu0 0.0
    %986 = vmatpush.xpose.msra.mxu0 0.0
    %987 = vmatpush.xpose.msra.mxu0 0.0
    %988 = vmatpush.xpose.msra.mxu0 0.0
    %989 = vmatpush.xpose.msra.mxu0 %v972
    %990 = vmatmul.f32.gmra.mxu0 %v969
    %v991 = vpop.f32.mrf.mxu0
    %v992 = vadd.f32 0.0, %v991
    %993 = vdwg.mxu0
    %v994 = vsel %vm334, %v992, -inf
    %995 = vmax.xlane.f32.xlu0 %v994
    %v996 = vpop.xlane.xlu0 %995
    %v997 = vsub.f32 %v992, %v996
    %v998 = vmul.f32 %v997, 1.442695
    %v999 = vpow.pop %v998
    %v1000 = vsel %vm334, %v999, 0.0
    %1001 = vadd.xlane.f32.xlu0 %v1000
    %v1002 = vpop.xlane.xlu0 %1001
    %v1003 = vrcp.pop %v1002
    %v1004 = vmul.f32 %v1002, %v1003
    %v1005 = vsub.f32 2.0, %v1004
    %v1006 = vmul.f32 %v1003, %v1005
    %v1007 = vmul.f32 %v999, %v1006
    %v1009 = vsel %vm334, %v920, 0
    %v1012 = vsel %vm334, %v1007, 0
    %1014 = vmatpush.xpose.msra.mxu0 0.0
    %1015 = vmatpush.xpose.msra.mxu0 0.0
    %1016 = vmatpush.xpose.msra.mxu0 0.0
    %1017 = vmatpush.xpose.msra.mxu0 0.0
    %1018 = vmatpush.xpose.msra.mxu0 0.0
    %1019 = vmatpush.xpose.msra.mxu0 0.0
    %1020 = vmatpush.xpose.msra.mxu0 0.0
    %1021 = vmatpush.xpose.msra.mxu0 0.0
    %1022 = vmatpush.xpose.msra.mxu0 0.0
    %1023 = vmatpush.xpose.msra.mxu0 0.0
    %1024 = vmatpush.xpose.msra.mxu0 0.0
    %1025 = vmatpush.xpose.msra.mxu0 0.0
    %1026 = vmatpush.xpose.msra.mxu0 0.0
    %1027 = vmatpush.xpose.msra.mxu0 0.0
    %1028 = vmatpush.xpose.msra.mxu0 0.0
    %1029 = vmatpush.xpose.msra.mxu0 %v1012
    %1030 = vmatmul.f32.gmra.mxu0 %v1009
    %v1031 = vpop.f32.mrf.mxu0
    %v1032 = vadd.f32 0.0, %v1031
    %1033 = vdwg.mxu0
    %1034 = vxpose.xlu0.b32.start [1/16] %v889, 128
    %1035 = vxpose.xlu0.b32.cont [2/16] 0.0, 128
    %1036 = vxpose.xlu0.b32.cont [3/16] 0.0, 128
    %1037 = vxpose.xlu0.b32.cont [4/16] 0.0, 128
    %1038 = vxpose.xlu0.b32.cont [5/16] 0.0, 128
    %1039 = vxpose.xlu0.b32.cont [6/16] 0.0, 128
    %1040 = vxpose.xlu0.b32.cont [7/16] 0.0, 128
    %1041 = vxpose.xlu0.b32.cont [8/16] 0.0, 128
    %1042 = vxpose.xlu0.b32.cont [9/16] 0.0, 128
    %1043 = vxpose.xlu0.b32.cont [10/16] 0.0, 128
    %1044 = vxpose.xlu0.b32.cont [11/16] 0.0, 128
    %1045 = vxpose.xlu0.b32.cont [12/16] 0.0, 128
    %1046 = vxpose.xlu0.b32.cont [13/16] 0.0, 128
    %1047 = vxpose.xlu0.b32.cont [14/16] 0.0, 128
    %1048 = vxpose.xlu0.b32.cont [15/16] 0.0, 128
    %1049 = vxpose.xlu0.b32.end [16/16] 0.0, 128
    %v1050 = vpop.trf.xlu0
    %v1051 = vpop.trf.xlu0
    %v1052 = vpop.trf.xlu0
    %v1053 = vpop.trf.xlu0
    %v1054 = vpop.trf.xlu0
    %v1055 = vpop.trf.xlu0
    %v1056 = vpop.trf.xlu0
    %v1057 = vpop.trf.xlu0
    %v1058 = vpop.trf.xlu0
    %v1059 = vpop.trf.xlu0
    %v1060 = vpop.trf.xlu0
    %v1061 = vpop.trf.xlu0
    %v1062 = vpop.trf.xlu0
    %v1063 = vpop.trf.xlu0
    %v1064 = vpop.trf.xlu0
    %v1065 = vpop.trf.xlu0
    %1066 = vrot.lane.b32.xlu0 %v845, 120
    %v1067 = vpop.permute.xlu0 %1066
    %v1069 = vsel %vm334, %v1050, 0
    %v1071 = vsel %vm334, %v1067, 0
    %1073 = vmatpush.xpose.msra.mxu0 0.0
    %1074 = vmatpush.xpose.msra.mxu0 0.0
    %1075 = vmatpush.xpose.msra.mxu0 0.0
    %1076 = vmatpush.xpose.msra.mxu0 0.0
    %1077 = vmatpush.xpose.msra.mxu0 0.0
    %1078 = vmatpush.xpose.msra.mxu0 0.0
    %1079 = vmatpush.xpose.msra.mxu0 0.0
    %1080 = vmatpush.xpose.msra.mxu0 0.0
    %1081 = vmatpush.xpose.msra.mxu0 0.0
    %1082 = vmatpush.xpose.msra.mxu0 0.0
    %1083 = vmatpush.xpose.msra.mxu0 0.0
    %1084 = vmatpush.xpose.msra.mxu0 0.0
    %1085 = vmatpush.xpose.msra.mxu0 0.0
    %1086 = vmatpush.xpose.msra.mxu0 0.0
    %1087 = vmatpush.xpose.msra.mxu0 0.0
    %1088 = vmatpush.xpose.msra.mxu0 %v1071
    %1089 = vmatmul.f32.gmra.mxu0 %v1069
    %v1090 = vpop.f32.mrf.mxu0
    %v1091 = vadd.f32 0.0, %v1090
    %1092 = vdwg.mxu0
    %v1093 = vsel %vm334, %v1091, -inf
    %1094 = vmax.xlane.f32.xlu0 %v1093
    %v1095 = vpop.xlane.xlu0 %1094
    %v1096 = vsub.f32 %v1091, %v1095
    %v1097 = vmul.f32 %v1096, 1.442695
    %v1098 = vpow.pop %v1097
    %v1099 = vsel %vm334, %v1098, 0.0
    %1100 = vadd.xlane.f32.xlu0 %v1099
    %v1101 = vpop.xlane.xlu0 %1100
    %v1102 = vrcp.pop %v1101
    %v1103 = vmul.f32 %v1101, %v1102
    %v1104 = vsub.f32 2.0, %v1103
    %v1105 = vmul.f32 %v1102, %v1104
    %v1106 = vmul.f32 %v1098, %v1105
    %v1108 = vsel %vm334, %v921, 0
    %v1111 = vsel %vm334, %v1106, 0
    %1113 = vmatpush.xpose.msra.mxu0 0.0
    %1114 = vmatpush.xpose.msra.mxu0 0.0
    %1115 = vmatpush.xpose.msra.mxu0 0.0
    %1116 = vmatpush.xpose.msra.mxu0 0.0
    %1117 = vmatpush.xpose.msra.mxu0 0.0
    %1118 = vmatpush.xpose.msra.mxu0 0.0
    %1119 = vmatpush.xpose.msra.mxu0 0.0
    %1120 = vmatpush.xpose.msra.mxu0 0.0
    %1121 = vmatpush.xpose.msra.mxu0 0.0
    %1122 = vmatpush.xpose.msra.mxu0 0.0
    %1123 = vmatpush.xpose.msra.mxu0 0.0
    %1124 = vmatpush.xpose.msra.mxu0 0.0
    %1125 = vmatpush.xpose.msra.mxu0 0.0
    %1126 = vmatpush.xpose.msra.mxu0 0.0
    %1127 = vmatpush.xpose.msra.mxu0 0.0
    %1128 = vmatpush.xpose.msra.mxu0 %v1111
    %1129 = vmatmul.f32.gmra.mxu0 %v1108
    %v1130 = vpop.f32.mrf.mxu0
    %v1131 = vadd.f32 0.0, %v1130
    %1132 = vdwg.mxu0
    %1133 = vxpose.xlu0.b32.start [1/16] %v890, 128
    %1134 = vxpose.xlu0.b32.cont [2/16] 0.0, 128
    %1135 = vxpose.xlu0.b32.cont [3/16] 0.0, 128
    %1136 = vxpose.xlu0.b32.cont [4/16] 0.0, 128
    %1137 = vxpose.xlu0.b32.cont [5/16] 0.0, 128
    %1138 = vxpose.xlu0.b32.cont [6/16] 0.0, 128
    %1139 = vxpose.xlu0.b32.cont [7/16] 0.0, 128
    %1140 = vxpose.xlu0.b32.cont [8/16] 0.0, 128
    %1141 = vxpose.xlu0.b32.cont [9/16] 0.0, 128
    %1142 = vxpose.xlu0.b32.cont [10/16] 0.0, 128
    %1143 = vxpose.xlu0.b32.cont [11/16] 0.0, 128
    %1144 = vxpose.xlu0.b32.cont [12/16] 0.0, 128
    %1145 = vxpose.xlu0.b32.cont [13/16] 0.0, 128
    %1146 = vxpose.xlu0.b32.cont [14/16] 0.0, 128
    %1147 = vxpose.xlu0.b32.cont [15/16] 0.0, 128
    %1148 = vxpose.xlu0.b32.end [16/16] 0.0, 128
    %v1149 = vpop.trf.xlu0
    %v1150 = vpop.trf.xlu0
    %v1151 = vpop.trf.xlu0
    %v1152 = vpop.trf.xlu0
    %v1153 = vpop.trf.xlu0
    %v1154 = vpop.trf.xlu0
    %v1155 = vpop.trf.xlu0
    %v1156 = vpop.trf.xlu0
    %v1157 = vpop.trf.xlu0
    %v1158 = vpop.trf.xlu0
    %v1159 = vpop.trf.xlu0
    %v1160 = vpop.trf.xlu0
    %v1161 = vpop.trf.xlu0
    %v1162 = vpop.trf.xlu0
    %v1163 = vpop.trf.xlu0
    %v1164 = vpop.trf.xlu0
    %1165 = vrot.lane.b32.xlu0 %v845, 112
    %v1166 = vpop.permute.xlu0 %1165
    %v1168 = vsel %vm334, %v1149, 0
    %v1170 = vsel %vm334, %v1166, 0
    %1172 = vmatpush.xpose.msra.mxu0 0.0
    %1173 = vmatpush.xpose.msra.mxu0 0.0
    %1174 = vmatpush.xpose.msra.mxu0 0.0
    %1175 = vmatpush.xpose.msra.mxu0 0.0
    %1176 = vmatpush.xpose.msra.mxu0 0.0
    %1177 = vmatpush.xpose.msra.mxu0 0.0
    %1178 = vmatpush.xpose.msra.mxu0 0.0
    %1179 = vmatpush.xpose.msra.mxu0 0.0
    %1180 = vmatpush.xpose.msra.mxu0 0.0
    %1181 = vmatpush.xpose.msra.mxu0 0.0
    %1182 = vmatpush.xpose.msra.mxu0 0.0
    %1183 = vmatpush.xpose.msra.mxu0 0.0
    %1184 = vmatpush.xpose.msra.mxu0 0.0
    %1185 = vmatpush.xpose.msra.mxu0 0.0
    %1186 = vmatpush.xpose.msra.mxu0 0.0
    %1187 = vmatpush.xpose.msra.mxu0 %v1170
    %1188 = vmatmul.f32.gmra.mxu0 %v1168
    %v1189 = vpop.f32.mrf.mxu0
    %v1190 = vadd.f32 0.0, %v1189
    %1191 = vdwg.mxu0
    %v1192 = vsel %vm334, %v1190, -inf
    %1193 = vmax.xlane.f32.xlu0 %v1192
    %v1194 = vpop.xlane.xlu0 %1193
    %v1195 = vsub.f32 %v1190, %v1194
    %v1196 = vmul.f32 %v1195, 1.442695
    %v1197 = vpow.pop %v1196
    %v1198 = vsel %vm334, %v1197, 0.0
    %1199 = vadd.xlane.f32.xlu0 %v1198
    %v1200 = vpop.xlane.xlu0 %1199
    %v1201 = vrcp.pop %v1200
    %v1202 = vmul.f32 %v1200, %v1201
    %v1203 = vsub.f32 2.0, %v1202
    %v1204 = vmul.f32 %v1201, %v1203
    %v1205 = vmul.f32 %v1197, %v1204
    %v1207 = vsel %vm334, %v922, 0
    %v1210 = vsel %vm334, %v1205, 0
    %1212 = vmatpush.xpose.msra.mxu0 0.0
    %1213 = vmatpush.xpose.msra.mxu0 0.0
    %1214 = vmatpush.xpose.msra.mxu0 0.0
    %1215 = vmatpush.xpose.msra.mxu0 0.0
    %1216 = vmatpush.xpose.msra.mxu0 0.0
    %1217 = vmatpush.xpose.msra.mxu0 0.0
    %1218 = vmatpush.xpose.msra.mxu0 0.0
    %1219 = vmatpush.xpose.msra.mxu0 0.0
    %1220 = vmatpush.xpose.msra.mxu0 0.0
    %1221 = vmatpush.xpose.msra.mxu0 0.0
    %1222 = vmatpush.xpose.msra.mxu0 0.0
    %1223 = vmatpush.xpose.msra.mxu0 0.0
    %1224 = vmatpush.xpose.msra.mxu0 0.0
    %1225 = vmatpush.xpose.msra.mxu0 0.0
    %1226 = vmatpush.xpose.msra.mxu0 0.0
    %1227 = vmatpush.xpose.msra.mxu0 %v1210
    %1228 = vmatmul.f32.gmra.mxu0 %v1207
    %v1229 = vpop.f32.mrf.mxu0
    %v1230 = vadd.f32 0.0, %v1229
    %1231 = vdwg.mxu0
    %1232 = vxpose.xlu0.b32.start [1/16] %v891, 128
    %1233 = vxpose.xlu0.b32.cont [2/16] 0.0, 128
    %1234 = vxpose.xlu0.b32.cont [3/16] 0.0, 128
    %1235 = vxpose.xlu0.b32.cont [4/16] 0.0, 128
    %1236 = vxpose.xlu0.b32.cont [5/16] 0.0, 128
    %1237 = vxpose.xlu0.b32.cont [6/16] 0.0, 128
    %1238 = vxpose.xlu0.b32.cont [7/16] 0.0, 128
    %1239 = vxpose.xlu0.b32.cont [8/16] 0.0, 128
    %1240 = vxpose.xlu0.b32.cont [9/16] 0.0, 128
    %1241 = vxpose.xlu0.b32.cont [10/16] 0.0, 128
    %1242 = vxpose.xlu0.b32.cont [11/16] 0.0, 128
    %1243 = vxpose.xlu0.b32.cont [12/16] 0.0, 128
    %1244 = vxpose.xlu0.b32.cont [13/16] 0.0, 128
    %1245 = vxpose.xlu0.b32.cont [14/16] 0.0, 128
    %1246 = vxpose.xlu0.b32.cont [15/16] 0.0, 128
    %1247 = vxpose.xlu0.b32.end [16/16] 0.0, 128
    %v1248 = vpop.trf.xlu0
    %v1249 = vpop.trf.xlu0
    %v1250 = vpop.trf.xlu0
    %v1251 = vpop.trf.xlu0
    %v1252 = vpop.trf.xlu0
    %v1253 = vpop.trf.xlu0
    %v1254 = vpop.trf.xlu0
    %v1255 = vpop.trf.xlu0
    %v1256 = vpop.trf.xlu0
    %v1257 = vpop.trf.xlu0
    %v1258 = vpop.trf.xlu0
    %v1259 = vpop.trf.xlu0
    %v1260 = vpop.trf.xlu0
    %v1261 = vpop.trf.xlu0
    %v1262 = vpop.trf.xlu0
    %v1263 = vpop.trf.xlu0
    %1264 = vrot.lane.b32.xlu0 %v845, 104
    %v1265 = vpop.permute.xlu0 %1264
    %v1267 = vsel %vm334, %v1248, 0
    %v1269 = vsel %vm334, %v1265, 0
    %1271 = vmatpush.xpose.msra.mxu0 0.0
    %1272 = vmatpush.xpose.msra.mxu0 0.0
    %1273 = vmatpush.xpose.msra.mxu0 0.0
    %1274 = vmatpush.xpose.msra.mxu0 0.0
    %1275 = vmatpush.xpose.msra.mxu0 0.0
    %1276 = vmatpush.xpose.msra.mxu0 0.0
    %1277 = vmatpush.xpose.msra.mxu0 0.0
    %1278 = vmatpush.xpose.msra.mxu0 0.0
    %1279 = vmatpush.xpose.msra.mxu0 0.0
    %1280 = vmatpush.xpose.msra.mxu0 0.0
    %1281 = vmatpush.xpose.msra.mxu0 0.0
    %1282 = vmatpush.xpose.msra.mxu0 0.0
    %1283 = vmatpush.xpose.msra.mxu0 0.0
    %1284 = vmatpush.xpose.msra.mxu0 0.0
    %1285 = vmatpush.xpose.msra.mxu0 0.0
    %1286 = vmatpush.xpose.msra.mxu0 %v1269
    %1287 = vmatmul.f32.gmra.mxu0 %v1267
    %v1288 = vpop.f32.mrf.mxu0
    %v1289 = vadd.f32 0.0, %v1288
    %1290 = vdwg.mxu0
    %v1291 = vsel %vm334, %v1289, -inf
    %1292 = vmax.xlane.f32.xlu0 %v1291
    %v1293 = vpop.xlane.xlu0 %1292
    %v1294 = vsub.f32 %v1289, %v1293
    %v1295 = vmul.f32 %v1294, 1.442695
    %v1296 = vpow.pop %v1295
    %v1297 = vsel %vm334, %v1296, 0.0
    %1298 = vadd.xlane.f32.xlu0 %v1297
    %v1299 = vpop.xlane.xlu0 %1298
    %v1300 = vrcp.pop %v1299
    %v1301 = vmul.f32 %v1299, %v1300
    %v1302 = vsub.f32 2.0, %v1301
    %v1303 = vmul.f32 %v1300, %v1302
    %v1304 = vmul.f32 %v1296, %v1303
    %v1306 = vsel %vm334, %v923, 0
    %v1309 = vsel %vm334, %v1304, 0
    %1311 = vmatpush.xpose.msra.mxu0 0.0
    %1312 = vmatpush.xpose.msra.mxu0 0.0
    %1313 = vmatpush.xpose.msra.mxu0 0.0
    %1314 = vmatpush.xpose.msra.mxu0 0.0
    %1315 = vmatpush.xpose.msra.mxu0 0.0
    %1316 = vmatpush.xpose.msra.mxu0 0.0
    %1317 = vmatpush.xpose.msra.mxu0 0.0
    %1318 = vmatpush.xpose.msra.mxu0 0.0
    %1319 = vmatpush.xpose.msra.mxu0 0.0
    %1320 = vmatpush.xpose.msra.mxu0 0.0
    %1321 = vmatpush.xpose.msra.mxu0 0.0
    %1322 = vmatpush.xpose.msra.mxu0 0.0
    %1323 = vmatpush.xpose.msra.mxu0 0.0
    %1324 = vmatpush.xpose.msra.mxu0 0.0
    %1325 = vmatpush.xpose.msra.mxu0 0.0
    %1326 = vmatpush.xpose.msra.mxu0 %v1309
    %1327 = vmatmul.f32.gmra.mxu0 %v1306
    %v1328 = vpop.f32.mrf.mxu0
    %v1329 = vadd.f32 0.0, %v1328
    %1330 = vdwg.mxu0
    %1331 = vxpose.xlu0.b32.start [1/16] %v1032, 128
    %1332 = vxpose.xlu0.b32.cont [2/16] %v1131, 128
    %1333 = vxpose.xlu0.b32.cont [3/16] %v1230, 128
    %1334 = vxpose.xlu0.b32.cont [4/16] %v1329, 128
    %1335 = vxpose.xlu0.b32.cont [5/16] 0.0, 128
    %1336 = vxpose.xlu0.b32.cont [6/16] 0.0, 128
    %1337 = vxpose.xlu0.b32.cont [7/16] 0.0, 128
    %1338 = vxpose.xlu0.b32.cont [8/16] 0.0, 128
    %1339 = vxpose.xlu0.b32.cont [9/16] 0.0, 128
    %1340 = vxpose.xlu0.b32.cont [10/16] 0.0, 128
    %1341 = vxpose.xlu0.b32.cont [11/16] 0.0, 128
    %1342 = vxpose.xlu0.b32.cont [12/16] 0.0, 128
    %1343 = vxpose.xlu0.b32.cont [13/16] 0.0, 128
    %1344 = vxpose.xlu0.b32.cont [14/16] 0.0, 128
    %1345 = vxpose.xlu0.b32.cont [15/16] 0.0, 128
    %1346 = vxpose.xlu0.b32.end [16/16] 0.0, 128
    %v1347 = vpop.trf.xlu0
    %v1348 = vpop.trf.xlu0
    %v1349 = vpop.trf.xlu0
    %v1350 = vpop.trf.xlu0
    %v1351 = vpop.trf.xlu0
    %v1352 = vpop.trf.xlu0
    %v1353 = vpop.trf.xlu0
    %v1354 = vpop.trf.xlu0
    %v1355 = vpop.trf.xlu0
    %v1356 = vpop.trf.xlu0
    %v1357 = vpop.trf.xlu0
    %v1358 = vpop.trf.xlu0
    %v1359 = vpop.trf.xlu0
    %v1360 = vpop.trf.xlu0
    %v1361 = vpop.trf.xlu0
    %v1362 = vpop.trf.xlu0
    %v1364 = vsel %vm166, %v1347, 0
    %1366 = vmatpush.msra.mxu0 0.0
    %1367 = vmatpush.msra.mxu0 0.0
    %1368 = vmatpush.msra.mxu0 0.0
    %1369 = vmatpush.msra.mxu0 0.0
    %1370 = vmatpush.msra.mxu0 0.0
    %1371 = vmatpush.msra.mxu0 0.0
    %1372 = vmatpush.msra.mxu0 0.0
    %1373 = vmatpush.msra.mxu0 0.0
    %1374 = vmatpush.msra.mxu0 0.0
    %1375 = vmatpush.msra.mxu0 0.0
    %1376 = vmatpush.msra.mxu0 0.0
    %1377 = vmatpush.msra.mxu0 0.0
    %1378 = vmatpush.msra.mxu0 %v156
    %1379 = vmatpush.msra.mxu0 %v155
    %1380 = vmatpush.msra.mxu0 %v154
    %1381 = vmatpush.msra.mxu0 %v153
    %1382 = vmatmul.f32.gmra.mxu0 %v1364
    %v1383 = vpop.f32.mrf.mxu0
    %v1384 = vadd.f32 %v730, %v1383
    %1385 = vdwg.mxu0
    %v1386 = vld [vmem:[#allocation2] sm:$0xff]
    %1388 = vrot.lane.b32.xlu0 %v1384, 32
    %v1389 = vpop.permute.xlu0 %1388
    %v1391 = vadd.f32 %v1386, %v1389
    %1393 = vrot.lane.b32.xlu0 %v1391, 96
    %v1394 = vpop.permute.xlu0 %1393
    %v1396 = vsel %vm166, %v1394, 0.0
    %1397 = vadd.xlane.f32.xlu0 %v1396
    %v1398 = vpop.xlane.xlu0 %1397
    %v1399 = vmul.f32 %v1398, %v765
    %v1400 = vsub.f32 %v1391, %v1399
    %v1401 = vmul.f32 %v1400, %v1400
    %1403 = vrot.lane.b32.xlu0 %v1401, 96
    %v1404 = vpop.permute.xlu0 %1403
    %v1406 = vsel %vm166, %v1404, 0.0
    %1407 = vadd.xlane.f32.xlu0 %v1406
    %v1408 = vpop.xlane.xlu0 %1407
    %v1409 = vmul.f32 %v1408, %v765
    %v1410 = vadd.f32 %v1409, 1e-05
    %v1411 = vrsqrt.pop %v1410
    %v1412 = vmul.f32 %v1411, %v1410
    %v1413 = vmul.f32 %v1412, %v1411
    %v1414 = vmul.f32 0.5, %v1413
    %v1415 = vsub.f32 1.5, %v1414
    %v1416 = vmul.f32 %v1411, %v1415
    %vm1417 = vweird.f32 %v1410
    %vm1418 = vweird.f32 %v1411
    %vm1419 = vmor %vm1417, %vm1418
    %v1420 = vsel %vm1419, %v1411, %v1416
    %v1421 = vmul.f32 %v1400, %v1420
    %1423 = vrot.lane.b32.xlu0 %v785, 32
    %v1424 = vpop.permute.xlu0 %1423
    %v1426 = vmul.f32 %v1421, %v1424
    %1428 = vrot.lane.b32.xlu0 %v787, 32
    %v1429 = vpop.permute.xlu0 %1428
    %v1431 = vadd.f32 %v1426, %v1429
    %vm1432 = vcmask 523520
    %1433 = vst.msk [vmem:[#allocation16] sm:$0xff] %vm1432, %v1431
    // Predicated region
    $region66: #{tpu_custom_call.1} parent=1 // pred_check
      _
    $region67: #{tpu_custom_call.1} parent=1 // pred_check_branch
      %1435 = sbr.rel (0) target = $region69
    $region68: #{tpu_custom_call.1} parent=1 // pred_region
      %1437 = vsyncadd [#allocation4], 0
      %s1439 = sshll.u32 [#allocation16], 4
      %s1440 = int_to_ptr.vmem [resolvable:$true] %s1439
      %s1441 = sshll.u32 %s8, 4
      %s1442 = int_to_ptr.hbm [resolvable:$true] %s1441
      %1444 = dma.vmem_to_hbm [thread:$0]  %s1440, 128, %s1442, [#allocation4]
    $region69: #{tpu_custom_call.1} parent=1 // pred_fallthru
      _
    // Predicated region
    $region70: #{tpu_custom_call.1} parent=1 // pred_check
      _
    $region71: #{tpu_custom_call.1} parent=1 // pred_check_branch
      %1446 = sbr.rel (0) target = $region73
    $region72: #{tpu_custom_call.1} parent=1 // pred_region
      %1448 = dma.done [#allocation4], 128
    $region73: #{tpu_custom_call.1} parent=1 // pred_fallthru
      _
    %1449 = vsyncpa [#allocation3], 1
    %1450 = vsyncpa [#allocation6], 1
    %1451 = vsyncpa [#allocation9], 1
    %1452 = vsyncpa [#allocation12], 1
    %1453 = vsyncpa [#allocation15], 1
    %1454 = vsyncpa [#allocation4], 1

</llo_original>
